<compile_context>
chip_gen: v7x
topology: tpu7x:2x2x1
jax: 0.10.0
libtpu: 0.0.40
codegen_flags: <defaults>
</compile_context>

<pallas_src>
import functools

import jax
import jax.numpy as jnp
import numpy as np
from jax.experimental import pallas as pl
from jax.experimental.pallas import tpu as pltpu

EV_A3_TO_GPA = 160.21766208
SIGMA2 = 25.0  # synthetic model width


def _det3(m):
    return (m[..., 0, 0] * (m[..., 1, 1] * m[..., 2, 2] - m[..., 1, 2] * m[..., 2, 1])
            - m[..., 0, 1] * (m[..., 1, 0] * m[..., 2, 2] - m[..., 1, 2] * m[..., 2, 0])
            + m[..., 0, 2] * (m[..., 1, 0] * m[..., 2, 1] - m[..., 1, 1] * m[..., 2, 0]))


def _potential_kernel(frac_ref, latT_ref, ngid_ref, nref_ref,
                      off_ref, src_ref, dst_ref, egid_ref,
                      energy_ref, forces_ref, virial_ref,
                      pos_sc,
                      *, data_mean, data_std, sigma2):
    f32 = jnp.float32
    t = pl.program_id(0)
    n_steps = pl.num_programs(0)

    B = latT_ref.shape[1]       # graphs
    N = frac_ref.shape[1]       # nodes (lane axis)
    TE = off_ref.shape[1]       # edges in this tile (lane axis)

    lat_T = latT_ref[...]       # (9, B), lat_T[3*i+j, b] = lattice[b, i, j]

    # ---- step 0: node positions into scratch (lane-dense), zero accumulators ----------
    @pl.when(t == 0)
    def _():
        ngid = ngid_ref[...]                                             # (1, N) int32
        b_iota = jax.lax.broadcasted_iota(jnp.int32, (B, N), 0)
        ngid_oh = (b_iota == ngid).astype(f32)                           # (B, N)
        latpn = jnp.dot(lat_T, ngid_oh, preferred_element_type=f32)      # (9, N)
        frac = frac_ref[...]                                             # (3, N)
        # pos[j, n] = sum_i frac[i, n] * lattice[gid(n), i, j]
        pos_rows = []
        for j in range(3):
            pos_rows.append(frac[0:1] * latpn[j:j + 1]
                            + frac[1:2] * latpn[3 + j:4 + j]
                            + frac[2:3] * latpn[6 + j:7 + j])
        pos_sc[...] = jnp.concatenate(pos_rows, axis=0)                  # (3, N)
        energy_ref[...] = jnp.zeros_like(energy_ref)
        forces_ref[...] = jnp.zeros_like(forces_ref)
        virial_ref[...] = jnp.zeros_like(virial_ref)

    # ---- per-edge-tile work -------------------------------------------------------------
    src = src_ref[...]          # (1, TE) int32
    dst = dst_ref[...]          # (1, TE) int32
    egid = egid_ref[...]        # (1, TE) int32 (padded edges have egid == B -> no graph)
    off = off_ref[...]          # (3, TE)

    contractE = (((1,), (1,)), ((), ()))   # contract the (lane) edge/node axis

    # per-edge lattice rows via graph one-hot, then pbc_offshift with 9 VPU MACs
    be_iota = jax.lax.broadcasted_iota(jnp.int32, (B, TE), 0)
    egid_oh = (be_iota == egid).astype(f32)                              # (B, TE)
    latpe = jnp.dot(lat_T, egid_oh, preferred_element_type=f32)          # (9, TE)
    offs_rows = []
    for j in range(3):
        offs_rows.append(off[0:1] * latpe[j:j + 1]
                         + off[1:2] * latpe[3 + j:4 + j]
                         + off[2:3] * latpe[6 + j:7 + j])
    offshift = jnp.concatenate(offs_rows, axis=0)                        # (3, TE)

    # gather pos[src], pos[dst] : (3, N) @ (N, TE) -> (3, TE)
    pos = pos_sc[...]                                                    # (3, N)
    n_iota = jax.lax.broadcasted_iota(jnp.int32, (N, TE), 0)
    src_oh = (n_iota == src).astype(f32)                                 # (N, TE)
    dst_oh = (n_iota == dst).astype(f32)                                 # (N, TE)
    pos_src = jnp.dot(pos, src_oh, preferred_element_type=f32)           # (3, TE)
    pos_dst = jnp.dot(pos, dst_oh, preferred_element_type=f32)           # (3, TE)

    # synthetic energy model: E_edge = exp(-|d|^2 / sigma^2)
    d = pos_dst + offshift - pos_src                                     # (3, TE)
    r2 = d[0:1] * d[0:1] + d[1:2] * d[1:2] + d[2:3] * d[2:3]             # (1, TE)
    e_edge = jnp.exp(-r2 * (1.0 / sigma2))                               # (1, TE)
    g = (-2.0 / sigma2) * e_edge * d                                     # dE_edge/dd, (3, TE)

    # forces = -data_std * scatter_add(dE/dd) : (3, TE) x (N, TE) -> (3, N)
    scat_dst = jax.lax.dot_general(g, dst_oh, contractE, preferred_element_type=f32)
    scat_src = jax.lax.dot_general(g, src_oh, contractE, preferred_element_type=f32)
    forces_ref[...] += (-data_std) * (scat_dst - scat_src)

    # per-graph raw model energies: (1, TE) x (B, TE) -> (1, B)
    energy_ref[...] += jax.lax.dot_general(e_edge, egid_oh, contractE,
                                           preferred_element_type=f32)

    # virial: dE/dst[b, k, j] = data_std * sum_{e in b} d[k, e] * g[j, e]
    dg_rows = [d[k:k + 1] * g[j:j + 1] for k in range(3) for j in range(3)]
    dg9 = jnp.concatenate(dg_rows, axis=0)                               # (9, TE)
    virial_ref[...] += jax.lax.dot_general(egid_oh, dg9, contractE,
                                           preferred_element_type=f32)  # (B, 9)

    # ---- last step: finalize (data_std/mean scaling + AtomRef element offsets) ----------
    @pl.when(t == n_steps - 1)
    def _():
        ngid = ngid_ref[...]                                             # (1, N)
        b_iota2 = jax.lax.broadcasted_iota(jnp.int32, (B, N), 0)
        ngid_oh2 = (b_iota2 == ngid).astype(f32)                         # (B, N)
        ref_graph = jax.lax.dot_general(nref_ref[...], ngid_oh2, contractE,
                                        preferred_element_type=f32)      # (1, B)
        energy_ref[...] = data_std * energy_ref[...] + data_mean + ref_graph
        virial_ref[...] = data_std * virial_ref[...]


def potential_forward(frac, lat, pbc_offset, src, dst, edge_gid, node_gid,
                      node_ref, data_mean=0.0, data_std=1.0, tile_e=128):
    """Returns (total_energies, forces, stresses, hessian) like Potential.forward."""
    f32 = jnp.float32
    B = lat.shape[0]
    N = frac.shape[0]
    E = pbc_offset.shape[0]

    # st = 0  ->  lattice = lat @ (I + st) = lat   (identity multiply dropped)
    lat = lat.astype(f32)
    lat_T = lat.reshape(B, 9).T                                          # (9, B)

    # pad the edge dimension to a multiple of tile_e; padded edges get egid=B (matches no
    # graph), src=dst=0, offset=0 -> zero contribution to energies/forces/virial.
    e_pad = ((E + tile_e - 1) // tile_e) * tile_e
    pad = e_pad - E
    off_T = jnp.pad(pbc_offset.astype(f32), ((0, pad), (0, 0))).T        # (3, E_pad)
    src_row = jnp.pad(src.astype(jnp.int32), (0, pad)).reshape(1, e_pad)
    dst_row = jnp.pad(dst.astype(jnp.int32), (0, pad)).reshape(1, e_pad)
    egid_row = jnp.pad(edge_gid.astype(jnp.int32), (0, pad),
                       constant_values=B).reshape(1, e_pad)

    frac_T = frac.astype(f32).T                                          # (3, N)
    ngid_row = node_gid.astype(jnp.int32).reshape(1, N)
    nref_row = node_ref.astype(f32).reshape(1, N)

    n_tiles = e_pad // tile_e
    kernel = functools.partial(_potential_kernel,
                               data_mean=float(data_mean),
                               data_std=float(data_std),
                               sigma2=SIGMA2)

    grid_spec = pltpu.PrefetchScalarGridSpec(
        num_scalar_prefetch=0,
        grid=(n_tiles,),
        in_specs=[
            pl.BlockSpec((3, N), lambda t: (0, 0)),        # frac_T       (full, resident)
            pl.BlockSpec((9, B), lambda t: (0, 0)),        # lat_T        (full, resident)
            pl.BlockSpec((1, N), lambda t: (0, 0)),        # node graph-id row
            pl.BlockSpec((1, N), lambda t: (0, 0)),        # node element-ref row
            pl.BlockSpec((3, tile_e), lambda t: (0, t)),   # pbc_offset tile
            pl.BlockSpec((1, tile_e), lambda t: (0, t)),   # src tile
            pl.BlockSpec((1, tile_e), lambda t: (0, t)),   # dst tile
            pl.BlockSpec((1, tile_e), lambda t: (0, t)),   # edge graph-id tile
        ],
        out_specs=(
            pl.BlockSpec((1, B), lambda t: (0, 0)),        # per-graph energies (resident)
            pl.BlockSpec((3, N), lambda t: (0, 0)),        # forces (transposed, resident)
            pl.BlockSpec((B, 9), lambda t: (0, 0)),        # dE/dstrain flat (resident)
        ),
        scratch_shapes=[pltpu.VMEM((3, N), f32)],          # node positions
    )

    energies_row, forces_T, virial9 = pl.pallas_call(
        kernel,
        out_shape=(jax.ShapeDtypeStruct((1, B), f32),
                   jax.ShapeDtypeStruct((3, N), f32),
                   jax.ShapeDtypeStruct((B, 9), f32)),
        grid_spec=grid_spec,
        compiler_params=pltpu.CompilerParams(
            dimension_semantics=("arbitrary",),            # edge axis is a reduction
            vmem_limit_bytes=32 * 1024 * 1024),
    )(frac_T, lat_T, ngid_row, nref_row, off_T, src_row, dst_row, egid_row)

    energies = energies_row[0]                             # (B,)
    forces = forces_T.T                                    # (N, 3)
    virial = virial9.reshape(B, 3, 3)                      # dE/dst
    volume = jnp.abs(_det3(lat))                           # (B,)
    sts = -virial                                          # -grads[1]
    scale = (1.0 / volume) * (-EV_A3_TO_GPA)
    stresses = (sts * scale[:, None, None]).reshape(B * 3, 3)   # torch.cat of (3,3) blocks
    hessian = jnp.zeros(1, f32)                            # calc_hessian=False
    return energies, forces, stresses, hessian


def _reference(frac, lat, pbc_offset, src, dst, egid, ngid, node_ref, data_mean, data_std):
    """Pure-JAX reference using autodiff (mirrors the PyTorch autograd path)."""
    f32 = jnp.float32
    B, N = lat.shape[0], frac.shape[0]

    def energy_fn(delta_pos, st):
        lattice = jnp.einsum("bij,bjk->bik", lat, jnp.eye(3, dtype=f32) + st)
        pos = jnp.einsum("ni,nij->nj", frac, lattice[ngid]) + delta_pos
        off = jnp.einsum("ei,eij->ej", pbc_offset, lattice[egid])
        d = pos[dst] + off - pos[src]
        e_edge = jnp.exp(-jnp.sum(d * d, axis=1) / SIGMA2)
        e_graph = jax.ops.segment_sum(e_edge, egid, num_segments=B)
        ref_graph = jax.ops.segment_sum(node_ref, ngid, num_segments=B)
        energies = data_std * e_graph + data_mean + ref_graph
        return jnp.sum(energies), energies

    (_, energies), (g_pos, g_st) = jax.value_and_grad(
        energy_fn, argnums=(0, 1), has_aux=True)(
        jnp.zeros((N, 3), f32), jnp.zeros((B, 3, 3), f32))
    forces = -g_pos
    vol = jnp.abs(_det3(lat))
    stresses = ((-g_st) * ((1.0 / vol) * -EV_A3_TO_GPA)[:, None, None]).reshape(B * 3, 3)
    return energies, forces, stresses


if __name__ == "__main__":
    key = jax.random.PRNGKey(0)
    B, nodes_per_graph, edges_per_graph, n_elem = 2, 8, 80, 5
    N = B * nodes_per_graph
    E = B * edges_per_graph          # 160 edges -> 2 edge tiles of 128 (exercise accum)

    k = jax.random.split(key, 8)
    frac = jax.random.uniform(k[0], (N, 3), jnp.float32)                     # frac_coords
    lat = (jnp.eye(3, dtype=jnp.float32)[None] * 4.0
           + 0.1 * jax.random.normal(k[1], (B, 3, 3), jnp.float32))          # lattices
    pbc_offset = jax.random.randint(k[2], (E, 3), -1, 2).astype(jnp.float32)
    edge_gid = jnp.repeat(jnp.arange(B, dtype=jnp.int32), edges_per_graph)
    node_gid = jnp.repeat(jnp.arange(B, dtype=jnp.int32), nodes_per_graph)
    src = jax.random.randint(k[3], (E,), 0, nodes_per_graph).astype(jnp.int32) \
        + edge_gid * nodes_per_graph
    dst = jax.random.randint(k[4], (E,), 0, nodes_per_graph).astype(jnp.int32) \
        + edge_gid * nodes_per_graph
    atom_types = jax.random.randint(k[5], (N,), 0, n_elem)
    element_refs = jax.random.normal(k[6], (n_elem,), jnp.float32)           # AtomRef offsets
    node_ref = element_refs[atom_types]
    data_mean, data_std = 0.1, 2.0                                           # buffers

    out = potential_forward(frac, lat, pbc_offset, src, dst, edge_gid, node_gid,
                            node_ref, data_mean, data_std, tile_e=128)
    energies, forces, stresses, hessian = jax.block_until_ready(out)

    e_ref, f_ref, s_ref = _reference(frac, lat, pbc_offset, src, dst,
                                     edge_gid, node_gid, node_ref, data_mean, data_std)
    np.testing.assert_allclose(np.asarray(energies), np.asarray(e_ref), rtol=2e-3, atol=2e-3)
    np.testing.assert_allclose(np.asarray(forces), np.asarray(f_ref), rtol=2e-3, atol=2e-3)
    np.testing.assert_allclose(np.asarray(stresses), np.asarray(s_ref), rtol=2e-3, atol=2e-3)
    assert energies.shape == (B,) and forces.shape == (N, 3)
    assert stresses.shape == (B * 3, 3) and hessian.shape == (1,)
    print("KERNEL_OK")
</pallas_src>

<mosaic_0001>
module attributes {stable_mosaic.version = 11 : i64} {
  func.func @_potential_kernel(%arg0: i32, %arg1: memref<3x16xf32, #tpu.memory_space<vmem>>, %arg2: memref<9x2xf32, #tpu.memory_space<vmem>>, %arg3: memref<1x16xi32, #tpu.memory_space<vmem>>, %arg4: memref<1x16xf32, #tpu.memory_space<vmem>>, %arg5: memref<3x128xf32, #tpu.memory_space<vmem>>, %arg6: memref<1x128xi32, #tpu.memory_space<vmem>>, %arg7: memref<1x128xi32, #tpu.memory_space<vmem>>, %arg8: memref<1x128xi32, #tpu.memory_space<vmem>>, %arg9: memref<1x2xf32, #tpu.memory_space<vmem>>, %arg10: memref<3x16xf32, #tpu.memory_space<vmem>>, %arg11: memref<2x9xf32, #tpu.memory_space<vmem>>, %arg12: memref<3x16xf32, #tpu.memory_space<vmem>>) attributes {dimension_semantics = [#tpu.dimension_semantics<arbitrary>], iteration_bounds = array<i64: 2>, scalar_prefetch = 0 : i64, scratch_operands = 1 : i64, tpu.core_type = #tpu.core_type<tc>, window_params = [{pipeline_mode = #tpu.pipeline_mode<synchronous>, transform_indices = @transform_0, window_bounds = array<i64: 3, 16>}, {pipeline_mode = #tpu.pipeline_mode<synchronous>, transform_indices = @transform_1, window_bounds = array<i64: 9, 2>}, {pipeline_mode = #tpu.pipeline_mode<synchronous>, transform_indices = @transform_2, window_bounds = array<i64: 1, 16>}, {pipeline_mode = #tpu.pipeline_mode<synchronous>, transform_indices = @transform_3, window_bounds = array<i64: 1, 16>}, {transform_indices = @transform_4, window_bounds = array<i64: 3, 128>}, {transform_indices = @transform_5, window_bounds = array<i64: 1, 128>}, {transform_indices = @transform_6, window_bounds = array<i64: 1, 128>}, {transform_indices = @transform_7, window_bounds = array<i64: 1, 128>}, {pipeline_mode = #tpu.pipeline_mode<synchronous>, transform_indices = @transform_8, window_bounds = array<i64: 1, 2>}, {pipeline_mode = #tpu.pipeline_mode<synchronous>, transform_indices = @transform_9, window_bounds = array<i64: 3, 16>}, {pipeline_mode = #tpu.pipeline_mode<synchronous>, transform_indices = @transform_10, window_bounds = array<i64: 2, 9>}]} {
    %c0 = arith.constant 0 : index
    %c0_0 = arith.constant 0 : index
    %0 = vector.load %arg2[%c0, %c0_0] : memref<9x2xf32, #tpu.memory_space<vmem>>, vector<9x2xf32>
    %c0_i32 = arith.constant 0 : i32
    %1 = arith.cmpi eq, %arg0, %c0_i32 : i32
    %2 = arith.extui %1 : i1 to i32
    %c0_i32_1 = arith.constant 0 : i32
    %3 = arith.cmpi ne, %2, %c0_i32_1 : i32
    scf.if %3 {
      %c0_35 = arith.constant 0 : index
      %c0_36 = arith.constant 0 : index
      %129 = vector.load %arg3[%c0_35, %c0_36] : memref<1x16xi32, #tpu.memory_space<vmem>>, vector<1x16xi32>
      %130 = tpu.iota {dimensions = array<i32: 0>} : vector<2x16xi32>
      %131 = vector.broadcast %129 : vector<1x16xi32> to vector<2x16xi32>
      %132 = arith.cmpi eq, %130, %131 : vector<2x16xi32>
      %133 = arith.extui %132 : vector<2x16xi1> to vector<2x16xi32>
      %134 = arith.sitofp %133 : vector<2x16xi32> to vector<2x16xf32>
      %cst_37 = arith.constant dense<0.000000e+00> : vector<9x16xf32>
      %135 = tpu.matmul %0, %134, %cst_37 {dimension_numbers = #tpu.dot_dimension_numbers<[1], [0], [0], [1], [0, 0, 1, 1], [], []>} : vector<9x2xf32>, vector<2x16xf32>, vector<9x16xf32> -> vector<9x16xf32>
      %c0_38 = arith.constant 0 : index
      %c0_39 = arith.constant 0 : index
      %136 = vector.load %arg1[%c0_38, %c0_39] : memref<3x16xf32, #tpu.memory_space<vmem>>, vector<3x16xf32>
      %137 = vector.extract_strided_slice %136 {offsets = [0, 0], sizes = [1, 16], strides = [1, 1]} : vector<3x16xf32> to vector<1x16xf32>
      %138 = vector.extract_strided_slice %135 {offsets = [0, 0], sizes = [1, 16], strides = [1, 1]} : vector<9x16xf32> to vector<1x16xf32>
      %139 = arith.mulf %137, %138 : vector<1x16xf32>
      %140 = vector.extract_strided_slice %136 {offsets = [1, 0], sizes = [1, 16], strides = [1, 1]} : vector<3x16xf32> to vector<1x16xf32>
      %141 = vector.extract_strided_slice %135 {offsets = [3, 0], sizes = [1, 16], strides = [1, 1]} : vector<9x16xf32> to vector<1x16xf32>
      %142 = arith.mulf %140, %141 : vector<1x16xf32>
      %143 = arith.addf %139, %142 : vector<1x16xf32>
      %144 = vector.extract_strided_slice %136 {offsets = [2, 0], sizes = [1, 16], strides = [1, 1]} : vector<3x16xf32> to vector<1x16xf32>
      %145 = vector.extract_strided_slice %135 {offsets = [6, 0], sizes = [1, 16], strides = [1, 1]} : vector<9x16xf32> to vector<1x16xf32>
      %146 = arith.mulf %144, %145 : vector<1x16xf32>
      %147 = arith.addf %143, %146 : vector<1x16xf32>
      %148 = vector.extract_strided_slice %136 {offsets = [0, 0], sizes = [1, 16], strides = [1, 1]} : vector<3x16xf32> to vector<1x16xf32>
      %149 = vector.extract_strided_slice %135 {offsets = [1, 0], sizes = [1, 16], strides = [1, 1]} : vector<9x16xf32> to vector<1x16xf32>
      %150 = arith.mulf %148, %149 : vector<1x16xf32>
      %151 = vector.extract_strided_slice %136 {offsets = [1, 0], sizes = [1, 16], strides = [1, 1]} : vector<3x16xf32> to vector<1x16xf32>
      %152 = vector.extract_strided_slice %135 {offsets = [4, 0], sizes = [1, 16], strides = [1, 1]} : vector<9x16xf32> to vector<1x16xf32>
      %153 = arith.mulf %151, %152 : vector<1x16xf32>
      %154 = arith.addf %150, %153 : vector<1x16xf32>
      %155 = vector.extract_strided_slice %136 {offsets = [2, 0], sizes = [1, 16], strides = [1, 1]} : vector<3x16xf32> to vector<1x16xf32>
      %156 = vector.extract_strided_slice %135 {offsets = [7, 0], sizes = [1, 16], strides = [1, 1]} : vector<9x16xf32> to vector<1x16xf32>
      %157 = arith.mulf %155, %156 : vector<1x16xf32>
      %158 = arith.addf %154, %157 : vector<1x16xf32>
      %159 = vector.extract_strided_slice %136 {offsets = [0, 0], sizes = [1, 16], strides = [1, 1]} : vector<3x16xf32> to vector<1x16xf32>
      %160 = vector.extract_strided_slice %135 {offsets = [2, 0], sizes = [1, 16], strides = [1, 1]} : vector<9x16xf32> to vector<1x16xf32>
      %161 = arith.mulf %159, %160 : vector<1x16xf32>
      %162 = vector.extract_strided_slice %136 {offsets = [1, 0], sizes = [1, 16], strides = [1, 1]} : vector<3x16xf32> to vector<1x16xf32>
      %163 = vector.extract_strided_slice %135 {offsets = [5, 0], sizes = [1, 16], strides = [1, 1]} : vector<9x16xf32> to vector<1x16xf32>
      %164 = arith.mulf %162, %163 : vector<1x16xf32>
      %165 = arith.addf %161, %164 : vector<1x16xf32>
      %166 = vector.extract_strided_slice %136 {offsets = [2, 0], sizes = [1, 16], strides = [1, 1]} : vector<3x16xf32> to vector<1x16xf32>
      %167 = vector.extract_strided_slice %135 {offsets = [8, 0], sizes = [1, 16], strides = [1, 1]} : vector<9x16xf32> to vector<1x16xf32>
      %168 = arith.mulf %166, %167 : vector<1x16xf32>
      %169 = arith.addf %165, %168 : vector<1x16xf32>
      %170 = tpu.concatenate %147, %158, %169 in 0 : vector<1x16xf32>, vector<1x16xf32>, vector<1x16xf32> -> vector<3x16xf32>
      %c0_40 = arith.constant 0 : index
      %c0_41 = arith.constant 0 : index
      %171 = vector.load %arg12[%c0_40, %c0_41] : memref<3x16xf32, #tpu.memory_space<vmem>>, vector<3x16xf32>
      tpu.vector_store %arg12[%c0_40, %c0_41], %170 {strides = array<i32>} : memref<3x16xf32, #tpu.memory_space<vmem>>, vector<3x16xf32>,
      %cst_42 = arith.constant 0.000000e+00 : f32
      %172 = vector.broadcast %cst_42 : f32 to vector<1x2xf32>
      %c0_43 = arith.constant 0 : index
      %c0_44 = arith.constant 0 : index
      %173 = vector.load %arg9[%c0_43, %c0_44] : memref<1x2xf32, #tpu.memory_space<vmem>>, vector<1x2xf32>
      tpu.vector_store %arg9[%c0_43, %c0_44], %172 {strides = array<i32>} : memref<1x2xf32, #tpu.memory_space<vmem>>, vector<1x2xf32>,
      %cst_45 = arith.constant 0.000000e+00 : f32
      %174 = vector.broadcast %cst_45 : f32 to vector<3x16xf32>
      %c0_46 = arith.constant 0 : index
      %c0_47 = arith.constant 0 : index
      %175 = vector.load %arg10[%c0_46, %c0_47] : memref<3x16xf32, #tpu.memory_space<vmem>>, vector<3x16xf32>
      tpu.vector_store %arg10[%c0_46, %c0_47], %174 {strides = array<i32>} : memref<3x16xf32, #tpu.memory_space<vmem>>, vector<3x16xf32>,
      %cst_48 = arith.constant 0.000000e+00 : f32
      %176 = vector.broadcast %cst_48 : f32 to vector<2x9xf32>
      %c0_49 = arith.constant 0 : index
      %c0_50 = arith.constant 0 : index
      %177 = vector.load %arg11[%c0_49, %c0_50] : memref<2x9xf32, #tpu.memory_space<vmem>>, vector<2x9xf32>
      tpu.vector_store %arg11[%c0_49, %c0_50], %176 {strides = array<i32>} : memref<2x9xf32, #tpu.memory_space<vmem>>, vector<2x9xf32>,
    } else {
    }
    %c0_2 = arith.constant 0 : index
    %c0_3 = arith.constant 0 : index
    %4 = vector.load %arg6[%c0_2, %c0_3] : memref<1x128xi32, #tpu.memory_space<vmem>>, vector<1x128xi32>
    %c0_4 = arith.constant 0 : index
    %c0_5 = arith.constant 0 : index
    %5 = vector.load %arg7[%c0_4, %c0_5] : memref<1x128xi32, #tpu.memory_space<vmem>>, vector<1x128xi32>
    %c0_6 = arith.constant 0 : index
    %c0_7 = arith.constant 0 : index
    %6 = vector.load %arg8[%c0_6, %c0_7] : memref<1x128xi32, #tpu.memory_space<vmem>>, vector<1x128xi32>
    %c0_8 = arith.constant 0 : index
    %c0_9 = arith.constant 0 : index
    %7 = vector.load %arg5[%c0_8, %c0_9] : memref<3x128xf32, #tpu.memory_space<vmem>>, vector<3x128xf32>
    %8 = tpu.iota {dimensions = array<i32: 0>} : vector<2x128xi32>
    %9 = vector.broadcast %6 : vector<1x128xi32> to vector<2x128xi32>
    %10 = arith.cmpi eq, %8, %9 : vector<2x128xi32>
    %11 = arith.extui %10 : vector<2x128xi1> to vector<2x128xi32>
    %12 = arith.sitofp %11 : vector<2x128xi32> to vector<2x128xf32>
    %cst = arith.constant dense<0.000000e+00> : vector<9x128xf32>
    %13 = tpu.matmul %0, %12, %cst {dimension_numbers = #tpu.dot_dimension_numbers<[1], [0], [0], [1], [0, 0, 1, 1], [], []>} : vector<9x2xf32>, vector<2x128xf32>, vector<9x128xf32> -> vector<9x128xf32>
    %14 = vector.extract_strided_slice %7 {offsets = [0, 0], sizes = [1, 128], strides = [1, 1]} : vector<3x128xf32> to vector<1x128xf32>
    %15 = vector.extract_strided_slice %13 {offsets = [0, 0], sizes = [1, 128], strides = [1, 1]} : vector<9x128xf32> to vector<1x128xf32>
    %16 = arith.mulf %14, %15 : vector<1x128xf32>
    %17 = vector.extract_strided_slice %7 {offsets = [1, 0], sizes = [1, 128], strides = [1, 1]} : vector<3x128xf32> to vector<1x128xf32>
    %18 = vector.extract_strided_slice %13 {offsets = [3, 0], sizes = [1, 128], strides = [1, 1]} : vector<9x128xf32> to vector<1x128xf32>
    %19 = arith.mulf %17, %18 : vector<1x128xf32>
    %20 = arith.addf %16, %19 : vector<1x128xf32>
    %21 = vector.extract_strided_slice %7 {offsets = [2, 0], sizes = [1, 128], strides = [1, 1]} : vector<3x128xf32> to vector<1x128xf32>
    %22 = vector.extract_strided_slice %13 {offsets = [6, 0], sizes = [1, 128], strides = [1, 1]} : vector<9x128xf32> to vector<1x128xf32>
    %23 = arith.mulf %21, %22 : vector<1x128xf32>
    %24 = arith.addf %20, %23 : vector<1x128xf32>
    %25 = vector.extract_strided_slice %7 {offsets = [0, 0], sizes = [1, 128], strides = [1, 1]} : vector<3x128xf32> to vector<1x128xf32>
    %26 = vector.extract_strided_slice %13 {offsets = [1, 0], sizes = [1, 128], strides = [1, 1]} : vector<9x128xf32> to vector<1x128xf32>
    %27 = arith.mulf %25, %26 : vector<1x128xf32>
    %28 = vector.extract_strided_slice %7 {offsets = [1, 0], sizes = [1, 128], strides = [1, 1]} : vector<3x128xf32> to vector<1x128xf32>
    %29 = vector.extract_strided_slice %13 {offsets = [4, 0], sizes = [1, 128], strides = [1, 1]} : vector<9x128xf32> to vector<1x128xf32>
    %30 = arith.mulf %28, %29 : vector<1x128xf32>
    %31 = arith.addf %27, %30 : vector<1x128xf32>
    %32 = vector.extract_strided_slice %7 {offsets = [2, 0], sizes = [1, 128], strides = [1, 1]} : vector<3x128xf32> to vector<1x128xf32>
    %33 = vector.extract_strided_slice %13 {offsets = [7, 0], sizes = [1, 128], strides = [1, 1]} : vector<9x128xf32> to vector<1x128xf32>
    %34 = arith.mulf %32, %33 : vector<1x128xf32>
    %35 = arith.addf %31, %34 : vector<1x128xf32>
    %36 = vector.extract_strided_slice %7 {offsets = [0, 0], sizes = [1, 128], strides = [1, 1]} : vector<3x128xf32> to vector<1x128xf32>
    %37 = vector.extract_strided_slice %13 {offsets = [2, 0], sizes = [1, 128], strides = [1, 1]} : vector<9x128xf32> to vector<1x128xf32>
    %38 = arith.mulf %36, %37 : vector<1x128xf32>
    %39 = vector.extract_strided_slice %7 {offsets = [1, 0], sizes = [1, 128], strides = [1, 1]} : vector<3x128xf32> to vector<1x128xf32>
    %40 = vector.extract_strided_slice %13 {offsets = [5, 0], sizes = [1, 128], strides = [1, 1]} : vector<9x128xf32> to vector<1x128xf32>
    %41 = arith.mulf %39, %40 : vector<1x128xf32>
    %42 = arith.addf %38, %41 : vector<1x128xf32>
    %43 = vector.extract_strided_slice %7 {offsets = [2, 0], sizes = [1, 128], strides = [1, 1]} : vector<3x128xf32> to vector<1x128xf32>
    %44 = vector.extract_strided_slice %13 {offsets = [8, 0], sizes = [1, 128], strides = [1, 1]} : vector<9x128xf32> to vector<1x128xf32>
    %45 = arith.mulf %43, %44 : vector<1x128xf32>
    %46 = arith.addf %42, %45 : vector<1x128xf32>
    %47 = tpu.concatenate %24, %35, %46 in 0 : vector<1x128xf32>, vector<1x128xf32>, vector<1x128xf32> -> vector<3x128xf32>
    %c0_10 = arith.constant 0 : index
    %c0_11 = arith.constant 0 : index
    %48 = vector.load %arg12[%c0_10, %c0_11] : memref<3x16xf32, #tpu.memory_space<vmem>>, vector<3x16xf32>
    %49 = tpu.iota {dimensions = array<i32: 0>} : vector<16x128xi32>
    %50 = vector.broadcast %4 : vector<1x128xi32> to vector<16x128xi32>
    %51 = arith.cmpi eq, %49, %50 : vector<16x128xi32>
    %52 = arith.extui %51 : vector<16x128xi1> to vector<16x128xi32>
    %53 = arith.sitofp %52 : vector<16x128xi32> to vector<16x128xf32>
    %54 = vector.broadcast %5 : vector<1x128xi32> to vector<16x128xi32>
    %55 = arith.cmpi eq, %49, %54 : vector<16x128xi32>
    %56 = arith.extui %55 : vector<16x128xi1> to vector<16x128xi32>
    %57 = arith.sitofp %56 : vector<16x128xi32> to vector<16x128xf32>
    %cst_12 = arith.constant dense<0.000000e+00> : vector<3x128xf32>
    %58 = tpu.matmul %48, %53, %cst_12 {dimension_numbers = #tpu.dot_dimension_numbers<[1], [0], [0], [1], [0, 0, 1, 1], [], []>} : vector<3x16xf32>, vector<16x128xf32>, vector<3x128xf32> -> vector<3x128xf32>
    %cst_13 = arith.constant dense<0.000000e+00> : vector<3x128xf32>
    %59 = tpu.matmul %48, %57, %cst_13 {dimension_numbers = #tpu.dot_dimension_numbers<[1], [0], [0], [1], [0, 0, 1, 1], [], []>} : vector<3x16xf32>, vector<16x128xf32>, vector<3x128xf32> -> vector<3x128xf32>
    %60 = arith.addf %59, %47 : vector<3x128xf32>
    %61 = arith.subf %60, %58 : vector<3x128xf32>
    %62 = vector.extract_strided_slice %61 {offsets = [0, 0], sizes = [1, 128], strides = [1, 1]} : vector<3x128xf32> to vector<1x128xf32>
    %63 = vector.extract_strided_slice %61 {offsets = [0, 0], sizes = [1, 128], strides = [1, 1]} : vector<3x128xf32> to vector<1x128xf32>
    %64 = arith.mulf %62, %63 : vector<1x128xf32>
    %65 = vector.extract_strided_slice %61 {offsets = [1, 0], sizes = [1, 128], strides = [1, 1]} : vector<3x128xf32> to vector<1x128xf32>
    %66 = vector.extract_strided_slice %61 {offsets = [1, 0], sizes = [1, 128], strides = [1, 1]} : vector<3x128xf32> to vector<1x128xf32>
    %67 = arith.mulf %65, %66 : vector<1x128xf32>
    %68 = arith.addf %64, %67 : vector<1x128xf32>
    %69 = vector.extract_strided_slice %61 {offsets = [2, 0], sizes = [1, 128], strides = [1, 1]} : vector<3x128xf32> to vector<1x128xf32>
    %70 = vector.extract_strided_slice %61 {offsets = [2, 0], sizes = [1, 128], strides = [1, 1]} : vector<3x128xf32> to vector<1x128xf32>
    %71 = arith.mulf %69, %70 : vector<1x128xf32>
    %72 = arith.addf %68, %71 : vector<1x128xf32>
    %cst_14 = arith.constant 0.000000e+00 : f32
    %73 = vector.broadcast %cst_14 : f32 to vector<1x128xf32>
    %74 = arith.subf %73, %72 : vector<1x128xf32>
    %cst_15 = arith.constant 4.000000e-02 : f32
    %75 = vector.broadcast %cst_15 : f32 to vector<1x128xf32>
    %76 = arith.mulf %74, %75 : vector<1x128xf32>
    %77 = math.exp %76 : vector<1x128xf32>
    %cst_16 = arith.constant -8.000000e-02 : f32
    %78 = vector.broadcast %cst_16 : f32 to vector<1x128xf32>
    %79 = arith.mulf %78, %77 : vector<1x128xf32>
    %80 = vector.broadcast %79 : vector<1x128xf32> to vector<3x128xf32>
    %81 = arith.mulf %80, %61 : vector<3x128xf32>
    %cst_17 = arith.constant dense<0.000000e+00> : vector<3x16xf32>
    %82 = tpu.matmul %81, %57, %cst_17 {dimension_numbers = #tpu.dot_dimension_numbers<[1], [1], [0], [0], [0, 0, 1, 0], [], []>} : vector<3x128xf32>, vector<16x128xf32>, vector<3x16xf32> -> vector<3x16xf32>
    %cst_18 = arith.constant dense<0.000000e+00> : vector<3x16xf32>
    %83 = tpu.matmul %81, %53, %cst_18 {dimension_numbers = #tpu.dot_dimension_numbers<[1], [1], [0], [0], [0, 0, 1, 0], [], []>} : vector<3x128xf32>, vector<16x128xf32>, vector<3x16xf32> -> vector<3x16xf32>
    %c0_19 = arith.constant 0 : index
    %c0_20 = arith.constant 0 : index
    %84 = vector.load %arg10[%c0_19, %c0_20] : memref<3x16xf32, #tpu.memory_space<vmem>>, vector<3x16xf32>
    %85 = arith.subf %82, %83 : vector<3x16xf32>
    %cst_21 = arith.constant -2.000000e+00 : f32
    %86 = vector.broadcast %cst_21 : f32 to vector<3x16xf32>
    %87 = arith.mulf %86, %85 : vector<3x16xf32>
    %88 = arith.addf %84, %87 : vector<3x16xf32>
    %c0_22 = arith.constant 0 : index
    %c0_23 = arith.constant 0 : index
    %89 = vector.load %arg10[%c0_22, %c0_23] : memref<3x16xf32, #tpu.memory_space<vmem>>, vector<3x16xf32>
    tpu.vector_store %arg10[%c0_22, %c0_23], %88 {strides = array<i32>} : memref<3x16xf32, #tpu.memory_space<vmem>>, vector<3x16xf32>,
    %c0_24 = arith.constant 0 : index
    %c0_25 = arith.constant 0 : index
    %90 = vector.load %arg9[%c0_24, %c0_25] : memref<1x2xf32, #tpu.memory_space<vmem>>, vector<1x2xf32>
    %cst_26 = arith.constant dense<0.000000e+00> : vector<1x2xf32>
    %91 = tpu.matmul %77, %12, %cst_26 {dimension_numbers = #tpu.dot_dimension_numbers<[1], [1], [0], [0], [0, 0, 1, 0], [], []>} : vector<1x128xf32>, vector<2x128xf32>, vector<1x2xf32> -> vector<1x2xf32>
    %92 = arith.addf %90, %91 : vector<1x2xf32>
    %c0_27 = arith.constant 0 : index
    %c0_28 = arith.constant 0 : index
    %93 = vector.load %arg9[%c0_27, %c0_28] : memref<1x2xf32, #tpu.memory_space<vmem>>, vector<1x2xf32>
    tpu.vector_store %arg9[%c0_27, %c0_28], %92 {strides = array<i32>} : memref<1x2xf32, #tpu.memory_space<vmem>>, vector<1x2xf32>,
    %94 = vector.extract_strided_slice %61 {offsets = [0, 0], sizes = [1, 128], strides = [1, 1]} : vector<3x128xf32> to vector<1x128xf32>
    %95 = vector.extract_strided_slice %81 {offsets = [0, 0], sizes = [1, 128], strides = [1, 1]} : vector<3x128xf32> to vector<1x128xf32>
    %96 = arith.mulf %94, %95 : vector<1x128xf32>
    %97 = vector.extract_strided_slice %61 {offsets = [0, 0], sizes = [1, 128], strides = [1, 1]} : vector<3x128xf32> to vector<1x128xf32>
    %98 = vector.extract_strided_slice %81 {offsets = [1, 0], sizes = [1, 128], strides = [1, 1]} : vector<3x128xf32> to vector<1x128xf32>
    %99 = arith.mulf %97, %98 : vector<1x128xf32>
    %100 = vector.extract_strided_slice %61 {offsets = [0, 0], sizes = [1, 128], strides = [1, 1]} : vector<3x128xf32> to vector<1x128xf32>
    %101 = vector.extract_strided_slice %81 {offsets = [2, 0], sizes = [1, 128], strides = [1, 1]} : vector<3x128xf32> to vector<1x128xf32>
    %102 = arith.mulf %100, %101 : vector<1x128xf32>
    %103 = vector.extract_strided_slice %61 {offsets = [1, 0], sizes = [1, 128], strides = [1, 1]} : vector<3x128xf32> to vector<1x128xf32>
    %104 = vector.extract_strided_slice %81 {offsets = [0, 0], sizes = [1, 128], strides = [1, 1]} : vector<3x128xf32> to vector<1x128xf32>
    %105 = arith.mulf %103, %104 : vector<1x128xf32>
    %106 = vector.extract_strided_slice %61 {offsets = [1, 0], sizes = [1, 128], strides = [1, 1]} : vector<3x128xf32> to vector<1x128xf32>
    %107 = vector.extract_strided_slice %81 {offsets = [1, 0], sizes = [1, 128], strides = [1, 1]} : vector<3x128xf32> to vector<1x128xf32>
    %108 = arith.mulf %106, %107 : vector<1x128xf32>
    %109 = vector.extract_strided_slice %61 {offsets = [1, 0], sizes = [1, 128], strides = [1, 1]} : vector<3x128xf32> to vector<1x128xf32>
    %110 = vector.extract_strided_slice %81 {offsets = [2, 0], sizes = [1, 128], strides = [1, 1]} : vector<3x128xf32> to vector<1x128xf32>
    %111 = arith.mulf %109, %110 : vector<1x128xf32>
    %112 = vector.extract_strided_slice %61 {offsets = [2, 0], sizes = [1, 128], strides = [1, 1]} : vector<3x128xf32> to vector<1x128xf32>
    %113 = vector.extract_strided_slice %81 {offsets = [0, 0], sizes = [1, 128], strides = [1, 1]} : vector<3x128xf32> to vector<1x128xf32>
    %114 = arith.mulf %112, %113 : vector<1x128xf32>
    %115 = vector.extract_strided_slice %61 {offsets = [2, 0], sizes = [1, 128], strides = [1, 1]} : vector<3x128xf32> to vector<1x128xf32>
    %116 = vector.extract_strided_slice %81 {offsets = [1, 0], sizes = [1, 128], strides = [1, 1]} : vector<3x128xf32> to vector<1x128xf32>
    %117 = arith.mulf %115, %116 : vector<1x128xf32>
    %118 = vector.extract_strided_slice %61 {offsets = [2, 0], sizes = [1, 128], strides = [1, 1]} : vector<3x128xf32> to vector<1x128xf32>
    %119 = vector.extract_strided_slice %81 {offsets = [2, 0], sizes = [1, 128], strides = [1, 1]} : vector<3x128xf32> to vector<1x128xf32>
    %120 = arith.mulf %118, %119 : vector<1x128xf32>
    %121 = tpu.concatenate %96, %99, %102, %105, %108, %111, %114, %117, %120 in 0 : vector<1x128xf32>, vector<1x128xf32>, vector<1x128xf32>, vector<1x128xf32>, vector<1x128xf32>, vector<1x128xf32>, vector<1x128xf32>, vector<1x128xf32>, vector<1x128xf32> -> vector<9x128xf32>
    %c0_29 = arith.constant 0 : index
    %c0_30 = arith.constant 0 : index
    %122 = vector.load %arg11[%c0_29, %c0_30] : memref<2x9xf32, #tpu.memory_space<vmem>>, vector<2x9xf32>
    %cst_31 = arith.constant dense<0.000000e+00> : vector<2x9xf32>
    %123 = tpu.matmul %12, %121, %cst_31 {dimension_numbers = #tpu.dot_dimension_numbers<[1], [1], [0], [0], [0, 0, 1, 0], [], []>} : vector<2x128xf32>, vector<9x128xf32>, vector<2x9xf32> -> vector<2x9xf32>
    %124 = arith.addf %122, %123 : vector<2x9xf32>
    %c0_32 = arith.constant 0 : index
    %c0_33 = arith.constant 0 : index
    %125 = vector.load %arg11[%c0_32, %c0_33] : memref<2x9xf32, #tpu.memory_space<vmem>>, vector<2x9xf32>
    tpu.vector_store %arg11[%c0_32, %c0_33], %124 {strides = array<i32>} : memref<2x9xf32, #tpu.memory_space<vmem>>, vector<2x9xf32>,
    %c1_i32 = arith.constant 1 : i32
    %126 = arith.cmpi eq, %arg0, %c1_i32 : i32
    %127 = arith.extui %126 : i1 to i32
    %c0_i32_34 = arith.constant 0 : i32
    %128 = arith.cmpi ne, %127, %c0_i32_34 : i32
    scf.if %128 {
      %c0_35 = arith.constant 0 : index
      %c0_36 = arith.constant 0 : index
      %129 = vector.load %arg3[%c0_35, %c0_36] : memref<1x16xi32, #tpu.memory_space<vmem>>, vector<1x16xi32>
      %130 = tpu.iota {dimensions = array<i32: 0>} : vector<2x16xi32>
      %131 = vector.broadcast %129 : vector<1x16xi32> to vector<2x16xi32>
      %132 = arith.cmpi eq, %130, %131 : vector<2x16xi32>
      %133 = arith.extui %132 : vector<2x16xi1> to vector<2x16xi32>
      %134 = arith.sitofp %133 : vector<2x16xi32> to vector<2x16xf32>
      %c0_37 = arith.constant 0 : index
      %c0_38 = arith.constant 0 : index
      %135 = vector.load %arg4[%c0_37, %c0_38] : memref<1x16xf32, #tpu.memory_space<vmem>>, vector<1x16xf32>
      %cst_39 = arith.constant dense<0.000000e+00> : vector<1x2xf32>
      %136 = tpu.matmul %135, %134, %cst_39 {dimension_numbers = #tpu.dot_dimension_numbers<[1], [1], [0], [0], [0, 0, 1, 0], [], []>} : vector<1x16xf32>, vector<2x16xf32>, vector<1x2xf32> -> vector<1x2xf32>
      %c0_40 = arith.constant 0 : index
      %c0_41 = arith.constant 0 : index
      %137 = vector.load %arg9[%c0_40, %c0_41] : memref<1x2xf32, #tpu.memory_space<vmem>>, vector<1x2xf32>
      %cst_42 = arith.constant 2.000000e+00 : f32
      %138 = vector.broadcast %cst_42 : f32 to vector<1x2xf32>
      %139 = arith.mulf %138, %137 : vector<1x2xf32>
      %cst_43 = arith.constant 1.000000e-01 : f32
      %140 = vector.broadcast %cst_43 : f32 to vector<1x2xf32>
      %141 = arith.addf %139, %140 : vector<1x2xf32>
      %142 = arith.addf %141, %136 : vector<1x2xf32>
      %c0_44 = arith.constant 0 : index
      %c0_45 = arith.constant 0 : index
      %143 = vector.load %arg9[%c0_44, %c0_45] : memref<1x2xf32, #tpu.memory_space<vmem>>, vector<1x2xf32>
      tpu.vector_store %arg9[%c0_44, %c0_45], %142 {strides = array<i32>} : memref<1x2xf32, #tpu.memory_space<vmem>>, vector<1x2xf32>,
      %c0_46 = arith.constant 0 : index
      %c0_47 = arith.constant 0 : index
      %144 = vector.load %arg11[%c0_46, %c0_47] : memref<2x9xf32, #tpu.memory_space<vmem>>, vector<2x9xf32>
      %cst_48 = arith.constant 2.000000e+00 : f32
      %145 = vector.broadcast %cst_48 : f32 to vector<2x9xf32>
      %146 = arith.mulf %145, %144 : vector<2x9xf32>
      %c0_49 = arith.constant 0 : index
      %c0_50 = arith.constant 0 : index
      %147 = vector.load %arg11[%c0_49, %c0_50] : memref<2x9xf32, #tpu.memory_space<vmem>>, vector<2x9xf32>
      tpu.vector_store %arg11[%c0_49, %c0_50], %146 {strides = array<i32>} : memref<2x9xf32, #tpu.memory_space<vmem>>, vector<2x9xf32>,
    } else {
    }
    return
  }
  func.func @transform_0(%arg0: i32) -> (i32, i32) {
    %c0_i32 = arith.constant 0 : i32
    %c0_i32_0 = arith.constant 0 : i32
    %c0_i32_1 = arith.constant 0 : i32
    return %c0_i32, %c0_i32_0 : i32, i32
  }
  func.func @transform_1(%arg0: i32) -> (i32, i32) {
    %c0_i32 = arith.constant 0 : i32
    %c0_i32_0 = arith.constant 0 : i32
    %c0_i32_1 = arith.constant 0 : i32
    return %c0_i32, %c0_i32_0 : i32, i32
  }
  func.func @transform_2(%arg0: i32) -> (i32, i32) {
    %c0_i32 = arith.constant 0 : i32
    %c0_i32_0 = arith.constant 0 : i32
    %c0_i32_1 = arith.constant 0 : i32
    return %c0_i32, %c0_i32_0 : i32, i32
  }
  func.func @transform_3(%arg0: i32) -> (i32, i32) {
    %c0_i32 = arith.constant 0 : i32
    %c0_i32_0 = arith.constant 0 : i32
    %c0_i32_1 = arith.constant 0 : i32
    return %c0_i32, %c0_i32_0 : i32, i32
  }
  func.func @transform_4(%arg0: i32) -> (i32, i32) {
    %c0_i32 = arith.constant 0 : i32
    %c0_i32_0 = arith.constant 0 : i32
    return %c0_i32, %arg0 : i32, i32
  }
  func.func @transform_5(%arg0: i32) -> (i32, i32) {
    %c0_i32 = arith.constant 0 : i32
    %c0_i32_0 = arith.constant 0 : i32
    return %c0_i32, %arg0 : i32, i32
  }
  func.func @transform_6(%arg0: i32) -> (i32, i32) {
    %c0_i32 = arith.constant 0 : i32
    %c0_i32_0 = arith.constant 0 : i32
    return %c0_i32, %arg0 : i32, i32
  }
  func.func @transform_7(%arg0: i32) -> (i32, i32) {
    %c0_i32 = arith.constant 0 : i32
    %c0_i32_0 = arith.constant 0 : i32
    return %c0_i32, %arg0 : i32, i32
  }
  func.func @transform_8(%arg0: i32) -> (i32, i32) {
    %c0_i32 = arith.constant 0 : i32
    %c0_i32_0 = arith.constant 0 : i32
    %c0_i32_1 = arith.constant 0 : i32
    return %c0_i32, %c0_i32_0 : i32, i32
  }
  func.func @transform_9(%arg0: i32) -> (i32, i32) {
    %c0_i32 = arith.constant 0 : i32
    %c0_i32_0 = arith.constant 0 : i32
    %c0_i32_1 = arith.constant 0 : i32
    return %c0_i32, %c0_i32_0 : i32, i32
  }
  func.func @transform_10(%arg0: i32) -> (i32, i32) {
    %c0_i32 = arith.constant 0 : i32
    %c0_i32_0 = arith.constant 0 : i32
    %c0_i32_1 = arith.constant 0 : i32
    return %c0_i32, %c0_i32_0 : i32, i32
  }
}

</mosaic_0001>

<llo_original>
// kernel: tpu_custom_call.1
$region0: #{tpu_custom_call.1}
  #allocation0 [shape = 'u32[]', space=smem, size = 0x4, offset = 0x4, fixed_abs, tag = 'smem constant byte address 0x4 - core index']
  #allocation1 [shape = 'u32[144,128]{1,0:T(1,128)}', space=vmem, size = 0x12000, scoped, tag = 'internal scratch']
  #allocation2 [shape = 'f32[3,16]{1,0:T(4,128)}', space=vmem, size = 0x800, scoped, tag = 'scratch operand']
  %s0 = inlined_call_operand.vmem [shape: f32[3,16], index: 0, kind: input, shape index: {}]
  %s1 = inlined_call_operand.vmem [shape: f32[9,2], index: 1, kind: input, shape index: {}]
  %s2 = inlined_call_operand.vmem [shape: s32[1,16], index: 2, kind: input, shape index: {}]
  %s3 = inlined_call_operand.vmem [shape: f32[1,16], index: 3, kind: input, shape index: {}]
  %s4 = inlined_call_operand.vmem [shape: f32[3,256], index: 4, kind: input, shape index: {}]
  %s5 = inlined_call_operand.vmem [shape: s32[1,256], index: 5, kind: input, shape index: {}]
  %s6 = inlined_call_operand.vmem [shape: s32[1,256], index: 6, kind: input, shape index: {}]
  %s7 = inlined_call_operand.vmem [shape: s32[1,256], index: 7, kind: input, shape index: {}]
  %s8 = inlined_call_operand.hbm [shape: f32[1,2], index: 8, kind: output, shape index: {0}]
  %s9 = inlined_call_operand.hbm [shape: f32[3,16], index: 9, kind: output, shape index: {1}]
  %s10 = inlined_call_operand.hbm [shape: f32[2,9], index: 10, kind: output, shape index: {2}]
  %11 = xla_tuple %s8, %s9, %s10
  %s12 = sld [smem:[#allocation0]]
  $region89: #{tpu_custom_call.1} parent=0
    _
  %s14 = ssub.s32 1, %s12
  %s15 = scalar_select 0, %s14, %s12
  $region1: #{tpu_custom_call.1} parent=0
    #allocation3 [shape = 'u8[512]{0}', space=vmem, size = 0x400, scoped, tag = 'output window, operand 0, single buffered']
    #allocation4 [shape = 's32[2]{0}', space=sflag, size = 0x8, scoped, tag = 'scoped memory for tpu_custom_call.1']
    #allocation5 [shape = 'u8[2048]{0}', space=vmem, size = 0x800, scoped, tag = 'output window, operand 1, single buffered']
    #allocation6 [shape = 's32[1]{0}', space=sflag, size = 0x4, scoped, tag = 'scoped memory for tpu_custom_call.1']
    #allocation7 [shape = 'u8[1024]{0}', space=vmem, size = 0x400, scoped, tag = 'output window, operand 2, single buffered']
    %16 = vsyncpa [#allocation4], 0
    %17 = vsyncpa [#allocation6], 0
    loop: start=0, step=1, limit=4
    $region2: #{tpu_custom_call.1} parent=1 // loop_pre_header
      _
    $region3: #{tpu_custom_call.1} parent=1 // loop_header
      %s19 = sphi 0, %s23
      %p20 = scmp.ge.s32.totalorder %s19, 4
      %s27 = sphi 0, %s27
      %s29 = sphi 0, %s27
      %s30 = sphi 0, %s29
      %s44 = sphi 0, %s30
      %s48 = sphi 0, %s48
      %s50 = sphi 0, %s48
      %s51 = sphi 0, %s50
      %s65 = sphi 0, %s51
      %s69 = sphi 0, %s69
      %s71 = sphi 0, %s69
      %s72 = sphi 0, %s71
      %s86 = sphi 0, %s72
      %s90 = sphi 0, %s90
      %s92 = sphi 0, %s90
      %s93 = sphi 0, %s92
      %s107 = sphi 0, %s93
      %s113 = sphi 0, %s115
      %s116 = sphi 0, %s113
      %s117 = sphi 0, %s116
      %s133 = sphi 0, %s117
      %s139 = sphi 0, %s141
      %s142 = sphi 0, %s139
      %s143 = sphi 0, %s142
      %s159 = sphi 0, %s143
      %s165 = sphi 0, %s167
      %s168 = sphi 0, %s165
      %s169 = sphi 0, %s168
      %s185 = sphi 0, %s169
      %s191 = sphi 0, %s193
      %s194 = sphi 0, %s191
      %s195 = sphi 0, %s194
      %s211 = sphi 0, %s195
      %s215 = sphi 0, %s215
      %s217 = sphi 0, %s215
      %s218 = sphi 0, %s217
      %s232 = sphi 0, %s218
      %s236 = sphi 0, %s236
      %s238 = sphi 0, %s236
      %s239 = sphi 0, %s238
      %s253 = sphi 0, %s239
      %s257 = sphi 0, %s257
      %s259 = sphi 0, %s257
      %s260 = sphi 0, %s259
      %s274 = sphi 0, %s260
    $region4: #{tpu_custom_call.1} parent=1 // loop_header_branch
      %22 = sbr.rel (%p20) target = $region8
    $region5: #{tpu_custom_call.1} parent=1 // loop_body
      %s24 = ssub.s32 %s19, 1
      %s25 = ssub.s32 %s19, 2
      %s26 = sadd.s32 %s19, 1
      %s28 = sadd.s32 %s27, 1
      %p31 = scmp.eq.s32.totalorder %s19, 1
      %p32 = scmp.ne.s32.totalorder %s27, %s29
      %p33 = scmp.eq.s32.totalorder %s19, 0
      %p34 = por %p32, %p33
      %p35 = scmp.ne.s32.totalorder %s27, %s29
      %p36 = scmp.eq.s32.totalorder %s24, 1
      %p37 = por %p35, %p36
      %p38 = scmp.ne.s32.totalorder %s29, %s30
      %p39 = scmp.eq.s32.totalorder %s24, 0
      %p40 = por %p38, %p39
      %p41 = scmp.ne.s32.totalorder %s29, %s30
      %p42 = scmp.eq.s32.totalorder %s25, 1
      %p43 = por %p41, %p42
      %p45 = scmp.ne.s32.totalorder %s30, %s44
      %p46 = scmp.eq.s32.totalorder %s25, 0
      %p47 = por %p45, %p46
      %s49 = sadd.s32 %s48, 1
      %p52 = scmp.eq.s32.totalorder %s19, 1
      %p53 = scmp.ne.s32.totalorder %s48, %s50
      %p54 = scmp.eq.s32.totalorder %s19, 0
      %p55 = por %p53, %p54
      %p56 = scmp.ne.s32.totalorder %s48, %s50
      %p57 = scmp.eq.s32.totalorder %s24, 1
      %p58 = por %p56, %p57
      %p59 = scmp.ne.s32.totalorder %s50, %s51
      %p60 = scmp.eq.s32.totalorder %s24, 0
      %p61 = por %p59, %p60
      %p62 = scmp.ne.s32.totalorder %s50, %s51
      %p63 = scmp.eq.s32.totalorder %s25, 1
      %p64 = por %p62, %p63
      %p66 = scmp.ne.s32.totalorder %s51, %s65
      %p67 = scmp.eq.s32.totalorder %s25, 0
      %p68 = por %p66, %p67
      %s70 = sadd.s32 %s69, 1
      %p73 = scmp.eq.s32.totalorder %s19, 1
      %p74 = scmp.ne.s32.totalorder %s69, %s71
      %p75 = scmp.eq.s32.totalorder %s19, 0
      %p76 = por %p74, %p75
      %p77 = scmp.ne.s32.totalorder %s69, %s71
      %p78 = scmp.eq.s32.totalorder %s24, 1
      %p79 = por %p77, %p78
      %p80 = scmp.ne.s32.totalorder %s71, %s72
      %p81 = scmp.eq.s32.totalorder %s24, 0
      %p82 = por %p80, %p81
      %p83 = scmp.ne.s32.totalorder %s71, %s72
      %p84 = scmp.eq.s32.totalorder %s25, 1
      %p85 = por %p83, %p84
      %p87 = scmp.ne.s32.totalorder %s72, %s86
      %p88 = scmp.eq.s32.totalorder %s25, 0
      %p89 = por %p87, %p88
      %s91 = sadd.s32 %s90, 1
      %p94 = scmp.eq.s32.totalorder %s19, 1
      %p95 = scmp.ne.s32.totalorder %s90, %s92
      %p96 = scmp.eq.s32.totalorder %s19, 0
      %p97 = por %p95, %p96
      %p98 = scmp.ne.s32.totalorder %s90, %s92
      %p99 = scmp.eq.s32.totalorder %s24, 1
      %p100 = por %p98, %p99
      %p101 = scmp.ne.s32.totalorder %s92, %s93
      %p102 = scmp.eq.s32.totalorder %s24, 0
      %p103 = por %p101, %p102
      %p104 = scmp.ne.s32.totalorder %s92, %s93
      %p105 = scmp.eq.s32.totalorder %s25, 1
      %p106 = por %p104, %p105
      %p108 = scmp.ne.s32.totalorder %s93, %s107
      %p109 = scmp.eq.s32.totalorder %s25, 0
      %p110 = por %p108, %p109
      %s111 = ssub.s32 %s19, %s26
      %p112 = scmp.eq.s32.totalorder %s111, 0
      %s114 = sadd.s32 %s113, 1
      %s115 = scalar_select %p112, %s113, %s114
      %p118 = pneg %p112
      %p119 = scmp.eq.s32.totalorder %s19, 1
      %p120 = por %p118, %p119
      %p121 = scmp.ne.s32.totalorder %s113, %s116
      %p122 = scmp.eq.s32.totalorder %s19, 0
      %p123 = por %p121, %p122
      %p124 = scmp.ne.s32.totalorder %s113, %s116
      %p125 = scmp.eq.s32.totalorder %s24, 1
      %p126 = por %p124, %p125
      %p127 = scmp.ne.s32.totalorder %s116, %s117
      %p128 = scmp.eq.s32.totalorder %s24, 0
      %p129 = por %p127, %p128
      %p130 = scmp.ne.s32.totalorder %s116, %s117
      %p131 = scmp.eq.s32.totalorder %s25, 1
      %p132 = por %p130, %p131
      %p134 = scmp.ne.s32.totalorder %s117, %s133
      %p135 = scmp.eq.s32.totalorder %s25, 0
      %p136 = por %p134, %p135
      %s137 = ssub.s32 %s19, %s26
      %p138 = scmp.eq.s32.totalorder %s137, 0
      %s140 = sadd.s32 %s139, 1
      %s141 = scalar_select %p138, %s139, %s140
      %p144 = pneg %p138
      %p145 = scmp.eq.s32.totalorder %s19, 1
      %p146 = por %p144, %p145
      %p147 = scmp.ne.s32.totalorder %s139, %s142
      %p148 = scmp.eq.s32.totalorder %s19, 0
      %p149 = por %p147, %p148
      %p150 = scmp.ne.s32.totalorder %s139, %s142
      %p151 = scmp.eq.s32.totalorder %s24, 1
      %p152 = por %p150, %p151
      %p153 = scmp.ne.s32.totalorder %s142, %s143
      %p154 = scmp.eq.s32.totalorder %s24, 0
      %p155 = por %p153, %p154
      %p156 = scmp.ne.s32.totalorder %s142, %s143
      %p157 = scmp.eq.s32.totalorder %s25, 1
      %p158 = por %p156, %p157
      %p160 = scmp.ne.s32.totalorder %s143, %s159
      %p161 = scmp.eq.s32.totalorder %s25, 0
      %p162 = por %p160, %p161
      %s163 = ssub.s32 %s19, %s26
      %p164 = scmp.eq.s32.totalorder %s163, 0
      %s166 = sadd.s32 %s165, 1
      %s167 = scalar_select %p164, %s165, %s166
      %p170 = pneg %p164
      %p171 = scmp.eq.s32.totalorder %s19, 1
      %p172 = por %p170, %p171
      %p173 = scmp.ne.s32.totalorder %s165, %s168
      %p174 = scmp.eq.s32.totalorder %s19, 0
      %p175 = por %p173, %p174
      %p176 = scmp.ne.s32.totalorder %s165, %s168
      %p177 = scmp.eq.s32.totalorder %s24, 1
      %p178 = por %p176, %p177
      %p179 = scmp.ne.s32.totalorder %s168, %s169
      %p180 = scmp.eq.s32.totalorder %s24, 0
      %p181 = por %p179, %p180
      %p182 = scmp.ne.s32.totalorder %s168, %s169
      %p183 = scmp.eq.s32.totalorder %s25, 1
      %p184 = por %p182, %p183
      %p186 = scmp.ne.s32.totalorder %s169, %s185
      %p187 = scmp.eq.s32.totalorder %s25, 0
      %p188 = por %p186, %p187
      %s189 = ssub.s32 %s19, %s26
      %p190 = scmp.eq.s32.totalorder %s189, 0
      %s192 = sadd.s32 %s191, 1
      %s193 = scalar_select %p190, %s191, %s192
      %p196 = pneg %p190
      %p197 = scmp.eq.s32.totalorder %s19, 1
      %p198 = por %p196, %p197
      %p199 = scmp.ne.s32.totalorder %s191, %s194
      %p200 = scmp.eq.s32.totalorder %s19, 0
      %p201 = por %p199, %p200
      %p202 = scmp.ne.s32.totalorder %s191, %s194
      %p203 = scmp.eq.s32.totalorder %s24, 1
      %p204 = por %p202, %p203
      %p205 = scmp.ne.s32.totalorder %s194, %s195
      %p206 = scmp.eq.s32.totalorder %s24, 0
      %p207 = por %p205, %p206
      %p208 = scmp.ne.s32.totalorder %s194, %s195
      %p209 = scmp.eq.s32.totalorder %s25, 1
      %p210 = por %p208, %p209
      %p212 = scmp.ne.s32.totalorder %s195, %s211
      %p213 = scmp.eq.s32.totalorder %s25, 0
      %p214 = por %p212, %p213
      %s216 = sadd.s32 %s215, 1
      %p219 = scmp.eq.s32.totalorder %s19, 1
      %p220 = scmp.ne.s32.totalorder %s215, %s217
      %p221 = scmp.eq.s32.totalorder %s19, 0
      %p222 = por %p220, %p221
      %p223 = scmp.ne.s32.totalorder %s215, %s217
      %p224 = scmp.eq.s32.totalorder %s24, 1
      %p225 = por %p223, %p224
      %p226 = scmp.ne.s32.totalorder %s217, %s218
      %p227 = scmp.eq.s32.totalorder %s24, 0
      %p228 = por %p226, %p227
      %p229 = scmp.ne.s32.totalorder %s217, %s218
      %p230 = scmp.eq.s32.totalorder %s25, 1
      %p231 = por %p229, %p230
      %p233 = scmp.ne.s32.totalorder %s218, %s232
      %p234 = scmp.eq.s32.totalorder %s25, 0
      %p235 = por %p233, %p234
      %s237 = sadd.s32 %s236, 1
      %p240 = scmp.eq.s32.totalorder %s19, 1
      %p241 = scmp.ne.s32.totalorder %s236, %s238
      %p242 = scmp.eq.s32.totalorder %s19, 0
      %p243 = por %p241, %p242
      %p244 = scmp.ne.s32.totalorder %s236, %s238
      %p245 = scmp.eq.s32.totalorder %s24, 1
      %p246 = por %p244, %p245
      %p247 = scmp.ne.s32.totalorder %s238, %s239
      %p248 = scmp.eq.s32.totalorder %s24, 0
      %p249 = por %p247, %p248
      %p250 = scmp.ne.s32.totalorder %s238, %s239
      %p251 = scmp.eq.s32.totalorder %s25, 1
      %p252 = por %p250, %p251
      %p254 = scmp.ne.s32.totalorder %s239, %s253
      %p255 = scmp.eq.s32.totalorder %s25, 0
      %p256 = por %p254, %p255
      %s258 = sadd.s32 %s257, 1
      %p261 = scmp.eq.s32.totalorder %s19, 1
      %p262 = scmp.ne.s32.totalorder %s257, %s259
      %p263 = scmp.eq.s32.totalorder %s19, 0
      %p264 = por %p262, %p263
      %p265 = scmp.ne.s32.totalorder %s257, %s259
      %p266 = scmp.eq.s32.totalorder %s24, 1
      %p267 = por %p265, %p266
      %p268 = scmp.ne.s32.totalorder %s259, %s260
      %p269 = scmp.eq.s32.totalorder %s24, 0
      %p270 = por %p268, %p269
      %p271 = scmp.ne.s32.totalorder %s259, %s260
      %p272 = scmp.eq.s32.totalorder %s25, 1
      %p273 = por %p271, %p272
      %p275 = scmp.ne.s32.totalorder %s260, %s274
      %p276 = scmp.eq.s32.totalorder %s25, 0
      %p277 = por %p275, %p276
      %p278 = scmp.le.s32.totalorder 1, %s19
      %p279 = scmp.lt.s32.totalorder %s19, 3
      %p280 = pnand %p278, %p279
      %p281 = pneg %p280
      // Predicated region
      $region9: #{tpu_custom_call.1} parent=5 // pred_check
        _
      $region10: #{tpu_custom_call.1} parent=5 // pred_check_branch
        %283 = sbr.rel (%p280) target = $region12
      $region11: #{tpu_custom_call.1} parent=5 // pred_region
        %s284 = ssub.s32 %s19, 1
        // Predicated region
        $region13: #{tpu_custom_call.1} parent=11 // pred_check
          %p285 = pneg %p40
        $region14: #{tpu_custom_call.1} parent=11 // pred_check_branch
          %287 = sbr.rel (%p285) target = $region16
        $region15: #{tpu_custom_call.1} parent=11 // pred_region
          _
        $region16: #{tpu_custom_call.1} parent=11 // pred_fallthru
          _
        // Predicated region
        $region17: #{tpu_custom_call.1} parent=11 // pred_check
          %p288 = pneg %p61
        $region18: #{tpu_custom_call.1} parent=11 // pred_check_branch
          %290 = sbr.rel (%p288) target = $region20
        $region19: #{tpu_custom_call.1} parent=11 // pred_region
          _
        $region20: #{tpu_custom_call.1} parent=11 // pred_fallthru
          _
        // Predicated region
        $region21: #{tpu_custom_call.1} parent=11 // pred_check
          %p291 = pneg %p82
        $region22: #{tpu_custom_call.1} parent=11 // pred_check_branch
          %293 = sbr.rel (%p291) target = $region24
        $region23: #{tpu_custom_call.1} parent=11 // pred_region
          _
        $region24: #{tpu_custom_call.1} parent=11 // pred_fallthru
          _
        // Predicated region
        $region25: #{tpu_custom_call.1} parent=11 // pred_check
          %p294 = pneg %p103
        $region26: #{tpu_custom_call.1} parent=11 // pred_check_branch
          %296 = sbr.rel (%p294) target = $region28
        $region27: #{tpu_custom_call.1} parent=11 // pred_region
          _
        $region28: #{tpu_custom_call.1} parent=11 // pred_fallthru
          _
      $region12: #{tpu_custom_call.1} parent=5 // pred_fallthru
        _
      %p297 = scmp.lt.s32.totalorder %s19, 2
      // Predicated region
      $region29: #{tpu_custom_call.1} parent=5 // pred_check
        %p298 = pneg %p297
      $region30: #{tpu_custom_call.1} parent=5 // pred_check_branch
        %300 = sbr.rel (%p298) target = $region32
      $region31: #{tpu_custom_call.1} parent=5 // pred_region
        // Predicated region
        $region33: #{tpu_custom_call.1} parent=31 // pred_check
          %p301 = pneg %p123
        $region34: #{tpu_custom_call.1} parent=31 // pred_check_branch
          %303 = sbr.rel (%p301) target = $region36
        $region35: #{tpu_custom_call.1} parent=31 // pred_region
          %p304 = scmp.lt.s32.totalorder %s19, 1
          %s305 = scalar_select %p304, %s19, 1
          %s306 = smul.addr %s305, 4
          %s307 = scalar_lea.vmem %s4, %s306
        $region36: #{tpu_custom_call.1} parent=31 // pred_fallthru
          _
        // Predicated region
        $region37: #{tpu_custom_call.1} parent=31 // pred_check
          %p308 = pneg %p149
        $region38: #{tpu_custom_call.1} parent=31 // pred_check_branch
          %310 = sbr.rel (%p308) target = $region40
        $region39: #{tpu_custom_call.1} parent=31 // pred_region
          %p311 = scmp.lt.s32.totalorder %s19, 1
          %s312 = scalar_select %p311, %s19, 1
          %s313 = scalar_lea.vmem %s5, %s312
        $region40: #{tpu_custom_call.1} parent=31 // pred_fallthru
          _
        // Predicated region
        $region41: #{tpu_custom_call.1} parent=31 // pred_check
          %p314 = pneg %p175
        $region42: #{tpu_custom_call.1} parent=31 // pred_check_branch
          %316 = sbr.rel (%p314) target = $region44
        $region43: #{tpu_custom_call.1} parent=31 // pred_region
          %p317 = scmp.lt.s32.totalorder %s19, 1
          %s318 = scalar_select %p317, %s19, 1
          %s319 = scalar_lea.vmem %s6, %s318
        $region44: #{tpu_custom_call.1} parent=31 // pred_fallthru
          _
        // Predicated region
        $region45: #{tpu_custom_call.1} parent=31 // pred_check
          %p320 = pneg %p201
        $region46: #{tpu_custom_call.1} parent=31 // pred_check_branch
          %322 = sbr.rel (%p320) target = $region48
        $region47: #{tpu_custom_call.1} parent=31 // pred_region
          %p323 = scmp.lt.s32.totalorder %s19, 1
          %s324 = scalar_select %p323, %s19, 1
          %s325 = scalar_lea.vmem %s7, %s324
        $region48: #{tpu_custom_call.1} parent=31 // pred_fallthru
          _
      $region32: #{tpu_custom_call.1} parent=5 // pred_fallthru
        _
      %p326 = scmp.le.s32.totalorder 1, %s19
      %p327 = scmp.lt.s32.totalorder %s19, 3
      %p328 = pnand %p326, %p327
      %p329 = pneg %p328
      // Predicated region
      $region49: #{tpu_custom_call.1} parent=5 // pred_check
        _
      $region50: #{tpu_custom_call.1} parent=5 // pred_check_branch
        %331 = sbr.rel (%p328) target = $region52
      $region51: #{tpu_custom_call.1} parent=5 // pred_region
        %s332 = ssub.s32 %s19, 1
        %p333 = pneg %p40
        %p334 = pneg %p37
        %p335 = pneg %p61
        %p336 = pneg %p58
        %p337 = pneg %p82
        %p338 = pneg %p79
        %p339 = pneg %p103
        %p340 = pneg %p100
        %p341 = scmp.lt.s32.totalorder %s24, 1
        %s342 = scalar_select %p341, %s24, 1
        %s343 = smul.addr %s342, 4
        %s344 = scalar_lea.vmem %s4, %s343
        %p345 = pneg %p129
        %p346 = pneg %p126
        %p347 = scmp.lt.s32.totalorder %s24, 1
        %s348 = scalar_select %p347, %s24, 1
        %s349 = scalar_lea.vmem %s5, %s348
        %p350 = pneg %p155
        %p351 = pneg %p152
        %p352 = scmp.lt.s32.totalorder %s24, 1
        %s353 = scalar_select %p352, %s24, 1
        %s354 = scalar_lea.vmem %s6, %s353
        %p355 = pneg %p181
        %p356 = pneg %p178
        %p357 = scmp.lt.s32.totalorder %s24, 1
        %s358 = scalar_select %p357, %s24, 1
        %s359 = scalar_lea.vmem %s7, %s358
        %p360 = pneg %p207
        %p361 = pneg %p204
        %p362 = pneg %p228
        %p363 = pneg %p225
        %p364 = pneg %p249
        %p365 = pneg %p246
        %p366 = pneg %p270
        %p367 = pneg %p267
        %p368 = scmp.lt.s32.totalorder %s24, 1
        %s369 = scalar_select %p368, %s24, 1
        %s370 = smul.addr %s369, 4
        %s371 = scalar_lea.vmem %s4, %s370
        %p372 = scmp.lt.s32.totalorder %s24, 1
        %s373 = scalar_select %p372, %s24, 1
        %s374 = scalar_lea.vmem %s5, %s373
        %p375 = scmp.lt.s32.totalorder %s24, 1
        %s376 = scalar_select %p375, %s24, 1
        %s377 = scalar_lea.vmem %s6, %s376
        %p378 = scmp.lt.s32.totalorder %s24, 1
        %s379 = scalar_select %p378, %s24, 1
        %s380 = scalar_lea.vmem %s7, %s379
        %v381 = vld [vmem:[%s1] sm:$0xff]
        %v382 = vld [vmem:[%s1 + $0x8] sm:$0x1]
        %p383 = scmp.eq.s32.totalorder %s24, 0
        // Predicated region
        $region53: #{tpu_custom_call.1} parent=51 // pred_check
          %p384 = pneg %p383
        $region54: #{tpu_custom_call.1} parent=51 // pred_check_branch
          %386 = sbr.rel (%p384) target = $region56
        $region55: #{tpu_custom_call.1} parent=51 // pred_region
          %v387 = vld [vmem:[%s2] sm:$0x1]
          %v388 = vlaneseq
          %v389 = vshrl.u32 %v388, 7
          %v390 = vlaneseq
          %v391 = vshrl.u32 %v390, 7
          %v392 = vsub.s32 0, %v391
          %v393 = vrot.slane %v387, %v392
          %vm394 = vcmp.eq.s32.totalorder %v389, %v393
          %v395 = vsel %vm394, 1, 0
          %v396 = vcvt.s32.f32 %v395
          %vm397 = vcmask 15360
          %v399 = vsel %vm397, %v381, 0
          %v402 = vsel %vm397, %v382, 0
          %vm404 = vcmask 1041408
          %v406 = vsel %vm404, %v396, 0
          %408 = vmatprep.subr.mxu0 0.0
          %409 = vmatpush1.msra.mxu0 %v406
          %410 = vmatprep.subr.mxu0 0.0
          %411 = vmatpush1.msra.mxu0 0.0
          %412 = vmatprep.subr.mxu0 0.0
          %413 = vmatpush1.msra.mxu0 0.0
          %414 = vmatprep.subr.mxu0 0.0
          %415 = vmatpush1.msra.mxu0 0.0
          %416 = vmatprep.subr.mxu0 0.0
          %417 = vmatpush1.msra.mxu0 0.0
          %418 = vmatprep.subr.mxu0 0.0
          %419 = vmatpush1.msra.mxu0 0.0
          %420 = vmatprep.subr.mxu0 0.0
          %421 = vmatpush1.msra.mxu0 0.0
          %422 = vmatprep.subr.mxu0 0.0
          %423 = vmatpush1.msra.mxu0 0.0
          %424 = vmatprep.subr.mxu0 0.0
          %425 = vmatpush1.msra.mxu0 0.0
          %426 = vmatprep.subr.mxu0 0.0
          %427 = vmatpush1.msra.mxu0 0.0
          %428 = vmatprep.subr.mxu0 0.0
          %429 = vmatpush1.msra.mxu0 0.0
          %430 = vmatprep.subr.mxu0 0.0
          %431 = vmatpush1.msra.mxu0 0.0
          %432 = vmatprep.subr.mxu0 0.0
          %433 = vmatpush1.msra.mxu0 0.0
          %434 = vmatprep.subr.mxu0 0.0
          %435 = vmatpush1.msra.mxu0 0.0
          %436 = vmatprep.subr.mxu0 0.0
          %437 = vmatpush1.msra.mxu0 0.0
          %438 = vmatprep.subr.mxu0 0.0
          %439 = vmatpush1.msra.mxu0 0.0
          %440 = vmatprep.subr.mxu0 0.0
          %441 = vmatpush1.msra.mxu0 0.0
          %442 = vmatprep.subr.mxu0 0.0
          %443 = vmatpush1.msra.mxu0 0.0
          %444 = vmatprep.subr.mxu0 0.0
          %445 = vmatpush1.msra.mxu0 0.0
          %446 = vmatprep.subr.mxu0 0.0
          %447 = vmatpush1.msra.mxu0 0.0
          %448 = vmatprep.subr.mxu0 0.0
          %449 = vmatpush1.msra.mxu0 0.0
          %450 = vmatprep.subr.mxu0 0.0
          %451 = vmatpush1.msra.mxu0 0.0
          %452 = vmatprep.subr.mxu0 0.0
          %453 = vmatpush1.msra.mxu0 0.0
          %454 = vmatprep.subr.mxu0 0.0
          %455 = vmatpush1.msra.mxu0 0.0
          %456 = vmatprep.subr.mxu0 0.0
          %457 = vmatpush1.msra.mxu0 0.0
          %458 = vmatprep.subr.mxu0 0.0
          %459 = vmatpush1.msra.mxu0 0.0
          %460 = vmatprep.subr.mxu0 0.0
          %461 = vmatpush1.msra.mxu0 0.0
          %462 = vmatprep.subr.mxu0 0.0
          %463 = vmatpush1.msra.mxu0 0.0
          %464 = vmatprep.subr.mxu0 0.0
          %465 = vmatpush1.msra.mxu0 0.0
          %466 = vmatprep.subr.mxu0 0.0
          %467 = vmatpush1.msra.mxu0 0.0
          %468 = vmatprep.subr.mxu0 0.0
          %469 = vmatpush1.msra.mxu0 0.0
          %470 = vmatprep.subr.mxu0 0.0
          %471 = vmatpush1.msra.mxu0 0.0
          %472 = vmatprep.mubr.f32.mxu0 0.0
          %473 = vmatmul.mubr.f32.gmra.mrb[0].mxu0 %v399
          %v474 = vpop.f32.mrb[0].mxu0
          %v475 = vadd.f32 0.0, %v474
          %v476 = vpop.f32.mrb[0].mxu0
          %477 = vmatprep.mubr.f32.mxu0 0.0
          %478 = vmatmul.mubr.f32.gmra.mrb[0].mxu0 %v402
          %v479 = vpop.f32.mrb[0].mxu0
          %v480 = vadd.f32 0.0, %v479
          %v481 = vpop.f32.mrb[0].mxu0
          %482 = vdwg.mxu0
          %v483 = vld [vmem:[%s0] sm:$0x7]
          %v484 = vmul.f32 %v483, %v475
          %v486 = vrot.slane %v475, 2
          %v488 = vmul.f32 %v483, %v486
          %v490 = vrot.slane %v488, 1
          %v492 = vadd.f32 %v484, %v490
          %v493 = vrot.slane %v475, 4
          %v495 = vmul.f32 %v483, %v493
          %v497 = vrot.slane %v495, 2
          %v499 = vadd.f32 %v492, %v497
          %v500 = vrot.slane %v475, 1
          %v502 = vmul.f32 %v483, %v500
          %v503 = vrot.slane %v475, 3
          %v505 = vmul.f32 %v483, %v503
          %v507 = vrot.slane %v505, 1
          %v509 = vadd.f32 %v502, %v507
          %v510 = vrot.slane %v475, 5
          %v512 = vmul.f32 %v483, %v510
          %v514 = vrot.slane %v512, 2
          %v516 = vadd.f32 %v509, %v514
          %v517 = vrot.slane %v495, 1
          %v519 = vadd.f32 %v488, %v517
          %v521 = vrot.slane %v480, 6
          %v523 = vmul.f32 %v483, %v521
          %v525 = vrot.slane %v523, 2
          %v527 = vadd.f32 %v519, %v525
          %v529 = vrot.slane %v516, 7
          %v532 = vrot.slane %v527, 6
          %vm534 = vcmask 1040384
          %v535 = vsel %vm534, %v499, %v529
          %v536 = vsel %vm404, %v535, %v532
          %vm537 = vcmask 124928
          %538 = vst.msk [vmem:[#allocation2] sm:$0x7] %vm537, %v536
          %vm539 = vcmask 8192
          %540 = vst.msk [vmem:[#allocation3] sm:$0x1] %vm539, 0.0
          %541 = vst.msk [vmem:[#allocation5] sm:$0x7] %vm537, 0.0
          %vm542 = vcmask 66560
          %543 = vst.msk [vmem:[#allocation7] sm:$0x3] %vm542, 0.0
        $region56: #{tpu_custom_call.1} parent=51 // pred_fallthru
          _
        %v544 = vld [vmem:[%s374] sm:$0x1]
        %v545 = vld [vmem:[%s377] sm:$0x1]
        %v546 = vld [vmem:[%s380] sm:$0x1]
        %v547 = vld [vmem:[%s371] sm:$0x7]
        %v548 = vlaneseq
        %v549 = vshrl.u32 %v548, 7
        %v550 = vlaneseq
        %v551 = vshrl.u32 %v550, 7
        %v552 = vsub.s32 0, %v551
        %v553 = vrot.slane %v546, %v552
        %vm554 = vcmp.eq.s32.totalorder %v549, %v553
        %v555 = vsel %vm554, 1, 0
        %v556 = vcvt.s32.f32 %v555
        %vm557 = vcmask 15360
        %v559 = vsel %vm557, %v381, 0
        %v562 = vsel %vm557, %v382, 0
        %vm564 = vcmask 1041408
        %v566 = vsel %vm564, %v556, 0
        %568 = vmatprep.subr.mxu0 0.0
        %569 = vmatpush1.msra.mxu0 %v566
        %570 = vmatprep.subr.mxu0 0.0
        %571 = vmatpush1.msra.mxu0 0.0
        %572 = vmatprep.subr.mxu0 0.0
        %573 = vmatpush1.msra.mxu0 0.0
        %574 = vmatprep.subr.mxu0 0.0
        %575 = vmatpush1.msra.mxu0 0.0
        %576 = vmatprep.subr.mxu0 0.0
        %577 = vmatpush1.msra.mxu0 0.0
        %578 = vmatprep.subr.mxu0 0.0
        %579 = vmatpush1.msra.mxu0 0.0
        %580 = vmatprep.subr.mxu0 0.0
        %581 = vmatpush1.msra.mxu0 0.0
        %582 = vmatprep.subr.mxu0 0.0
        %583 = vmatpush1.msra.mxu0 0.0
        %584 = vmatprep.subr.mxu0 0.0
        %585 = vmatpush1.msra.mxu0 0.0
        %586 = vmatprep.subr.mxu0 0.0
        %587 = vmatpush1.msra.mxu0 0.0
        %588 = vmatprep.subr.mxu0 0.0
        %589 = vmatpush1.msra.mxu0 0.0
        %590 = vmatprep.subr.mxu0 0.0
        %591 = vmatpush1.msra.mxu0 0.0
        %592 = vmatprep.subr.mxu0 0.0
        %593 = vmatpush1.msra.mxu0 0.0
        %594 = vmatprep.subr.mxu0 0.0
        %595 = vmatpush1.msra.mxu0 0.0
        %596 = vmatprep.subr.mxu0 0.0
        %597 = vmatpush1.msra.mxu0 0.0
        %598 = vmatprep.subr.mxu0 0.0
        %599 = vmatpush1.msra.mxu0 0.0
        %600 = vmatprep.subr.mxu0 0.0
        %601 = vmatpush1.msra.mxu0 0.0
        %602 = vmatprep.subr.mxu0 0.0
        %603 = vmatpush1.msra.mxu0 0.0
        %604 = vmatprep.subr.mxu0 0.0
        %605 = vmatpush1.msra.mxu0 0.0
        %606 = vmatprep.subr.mxu0 0.0
        %607 = vmatpush1.msra.mxu0 0.0
        %608 = vmatprep.subr.mxu0 0.0
        %609 = vmatpush1.msra.mxu0 0.0
        %610 = vmatprep.subr.mxu0 0.0
        %611 = vmatpush1.msra.mxu0 0.0
        %612 = vmatprep.subr.mxu0 0.0
        %613 = vmatpush1.msra.mxu0 0.0
        %614 = vmatprep.subr.mxu0 0.0
        %615 = vmatpush1.msra.mxu0 0.0
        %616 = vmatprep.subr.mxu0 0.0
        %617 = vmatpush1.msra.mxu0 0.0
        %618 = vmatprep.subr.mxu0 0.0
        %619 = vmatpush1.msra.mxu0 0.0
        %620 = vmatprep.subr.mxu0 0.0
        %621 = vmatpush1.msra.mxu0 0.0
        %622 = vmatprep.subr.mxu0 0.0
        %623 = vmatpush1.msra.mxu0 0.0
        %624 = vmatprep.subr.mxu0 0.0
        %625 = vmatpush1.msra.mxu0 0.0
        %626 = vmatprep.subr.mxu0 0.0
        %627 = vmatpush1.msra.mxu0 0.0
        %628 = vmatprep.subr.mxu0 0.0
        %629 = vmatpush1.msra.mxu0 0.0
        %630 = vmatprep.subr.mxu0 0.0
        %631 = vmatpush1.msra.mxu0 0.0
        %632 = vmatprep.mubr.f32.mxu0 0.0
        %633 = vmatmul.mubr.f32.gmra.mrb[0].mxu0 %v559
        %v634 = vpop.f32.mrb[0].mxu0
        %v635 = vadd.f32 0.0, %v634
        %v636 = vpop.f32.mrb[0].mxu0
        %637 = vmatprep.mubr.f32.mxu0 0.0
        %638 = vmatmul.mubr.f32.gmra.mrb[0].mxu0 %v562
        %v639 = vpop.f32.mrb[0].mxu0
        %v640 = vadd.f32 0.0, %v639
        %v641 = vpop.f32.mrb[0].mxu0
        %642 = vdwg.mxu0
        %v643 = vmul.f32 %v547, %v635
        %v645 = vrot.slane %v635, 2
        %v647 = vmul.f32 %v547, %v645
        %v649 = vrot.slane %v647, 1
        %v651 = vadd.f32 %v643, %v649
        %v652 = vrot.slane %v635, 4
        %v654 = vmul.f32 %v547, %v652
        %v656 = vrot.slane %v654, 2
        %v658 = vadd.f32 %v651, %v656
        %v659 = vrot.slane %v635, 1
        %v661 = vmul.f32 %v547, %v659
        %v662 = vrot.slane %v635, 3
        %v664 = vmul.f32 %v547, %v662
        %v666 = vrot.slane %v664, 1
        %v668 = vadd.f32 %v661, %v666
        %v669 = vrot.slane %v635, 5
        %v671 = vmul.f32 %v547, %v669
        %v673 = vrot.slane %v671, 2
        %v675 = vadd.f32 %v668, %v673
        %v676 = vrot.slane %v654, 1
        %v678 = vadd.f32 %v647, %v676
        %v680 = vrot.slane %v640, 6
        %v682 = vmul.f32 %v547, %v680
        %v684 = vrot.slane %v682, 2
        %v686 = vadd.f32 %v678, %v684
        %v688 = vrot.slane %v675, 7
        %v691 = vrot.slane %v686, 6
        %vm693 = vcmask 1040384
        %v694 = vsel %vm693, %v658, %v688
        %v695 = vsel %vm564, %v694, %v691
        %v696 = vld [vmem:[#allocation2] sm:$0x7]
        %v697 = vadd.s32 %v549, 8
        %v698 = vlaneseq
        %v699 = vshrl.u32 %v698, 7
        %v700 = vsub.s32 0, %v699
        %v701 = vrot.slane %v544, %v700
        %vm702 = vcmp.eq.s32.totalorder %v549, %v701
        %vm703 = vcmp.eq.s32.totalorder %v697, %v701
        %v704 = vsel %vm702, 1, 0
        %v705 = vsel %vm703, 1, 0
        %v706 = vcvt.s32.f32 %v704
        %v707 = vcvt.s32.f32 %v705
        %v708 = vlaneseq
        %v709 = vshrl.u32 %v708, 7
        %v710 = vsub.s32 0, %v709
        %v711 = vrot.slane %v545, %v710
        %vm712 = vcmp.eq.s32.totalorder %v549, %v711
        %vm713 = vcmp.eq.s32.totalorder %v697, %v711
        %v714 = vsel %vm712, 1, 0
        %v715 = vsel %vm713, 1, 0
        %v716 = vcvt.s32.f32 %v714
        %v717 = vcvt.s32.f32 %v715
        %vm718 = vcmask 130048
        %v720 = vsel %vm718, %v696, 0
        %722 = vmatprep.subr.mxu0 0.0
        %723 = vmatpush1.msra.mxu0 %v706
        %724 = vmatprep.subr.mxu0 0.0
        %725 = vmatpush1.msra.mxu0 %v707
        %726 = vmatprep.subr.mxu0 0.0
        %727 = vmatpush1.msra.mxu0 0.0
        %728 = vmatprep.subr.mxu0 0.0
        %729 = vmatpush1.msra.mxu0 0.0
        %730 = vmatprep.subr.mxu0 0.0
        %731 = vmatpush1.msra.mxu0 0.0
        %732 = vmatprep.subr.mxu0 0.0
        %733 = vmatpush1.msra.mxu0 0.0
        %734 = vmatprep.subr.mxu0 0.0
        %735 = vmatpush1.msra.mxu0 0.0
        %736 = vmatprep.subr.mxu0 0.0
        %737 = vmatpush1.msra.mxu0 0.0
        %738 = vmatprep.subr.mxu0 0.0
        %739 = vmatpush1.msra.mxu0 0.0
        %740 = vmatprep.subr.mxu0 0.0
        %741 = vmatpush1.msra.mxu0 0.0
        %742 = vmatprep.subr.mxu0 0.0
        %743 = vmatpush1.msra.mxu0 0.0
        %744 = vmatprep.subr.mxu0 0.0
        %745 = vmatpush1.msra.mxu0 0.0
        %746 = vmatprep.subr.mxu0 0.0
        %747 = vmatpush1.msra.mxu0 0.0
        %748 = vmatprep.subr.mxu0 0.0
        %749 = vmatpush1.msra.mxu0 0.0
        %750 = vmatprep.subr.mxu0 0.0
        %751 = vmatpush1.msra.mxu0 0.0
        %752 = vmatprep.subr.mxu0 0.0
        %753 = vmatpush1.msra.mxu0 0.0
        %754 = vmatprep.subr.mxu0 0.0
        %755 = vmatpush1.msra.mxu0 0.0
        %756 = vmatprep.subr.mxu0 0.0
        %757 = vmatpush1.msra.mxu0 0.0
        %758 = vmatprep.subr.mxu0 0.0
        %759 = vmatpush1.msra.mxu0 0.0
        %760 = vmatprep.subr.mxu0 0.0
        %761 = vmatpush1.msra.mxu0 0.0
        %762 = vmatprep.subr.mxu0 0.0
        %763 = vmatpush1.msra.mxu0 0.0
        %764 = vmatprep.subr.mxu0 0.0
        %765 = vmatpush1.msra.mxu0 0.0
        %766 = vmatprep.subr.mxu0 0.0
        %767 = vmatpush1.msra.mxu0 0.0
        %768 = vmatprep.subr.mxu0 0.0
        %769 = vmatpush1.msra.mxu0 0.0
        %770 = vmatprep.subr.mxu0 0.0
        %771 = vmatpush1.msra.mxu0 0.0
        %772 = vmatprep.subr.mxu0 0.0
        %773 = vmatpush1.msra.mxu0 0.0
        %774 = vmatprep.subr.mxu0 0.0
        %775 = vmatpush1.msra.mxu0 0.0
        %776 = vmatprep.subr.mxu0 0.0
        %777 = vmatpush1.msra.mxu0 0.0
        %778 = vmatprep.subr.mxu0 0.0
        %779 = vmatpush1.msra.mxu0 0.0
        %780 = vmatprep.subr.mxu0 0.0
        %781 = vmatpush1.msra.mxu0 0.0
        %782 = vmatprep.subr.mxu0 0.0
        %783 = vmatpush1.msra.mxu0 0.0
        %784 = vmatprep.subr.mxu0 0.0
        %785 = vmatpush1.msra.mxu0 0.0
        %786 = vmatprep.mubr.f32.mxu0 0.0
        %787 = vmatmul.mubr.f32.gmra.mrb[0].mxu0 %v720
        %v788 = vpop.f32.mrb[0].mxu0
        %v789 = vadd.f32 0.0, %v788
        %v790 = vpop.f32.mrb[0].mxu0
        %791 = vdwg.mxu0
        %792 = vmatprep.subr.mxu0 0.0
        %793 = vmatpush1.msra.mxu0 %v716
        %794 = vmatprep.subr.mxu0 0.0
        %795 = vmatpush1.msra.mxu0 %v717
        %796 = vmatprep.subr.mxu0 0.0
        %797 = vmatpush1.msra.mxu0 0.0
        %798 = vmatprep.subr.mxu0 0.0
        %799 = vmatpush1.msra.mxu0 0.0
        %800 = vmatprep.subr.mxu0 0.0
        %801 = vmatpush1.msra.mxu0 0.0
        %802 = vmatprep.subr.mxu0 0.0
        %803 = vmatpush1.msra.mxu0 0.0
        %804 = vmatprep.subr.mxu0 0.0
        %805 = vmatpush1.msra.mxu0 0.0
        %806 = vmatprep.subr.mxu0 0.0
        %807 = vmatpush1.msra.mxu0 0.0
        %808 = vmatprep.subr.mxu0 0.0
        %809 = vmatpush1.msra.mxu0 0.0
        %810 = vmatprep.subr.mxu0 0.0
        %811 = vmatpush1.msra.mxu0 0.0
        %812 = vmatprep.subr.mxu0 0.0
        %813 = vmatpush1.msra.mxu0 0.0
        %814 = vmatprep.subr.mxu0 0.0
        %815 = vmatpush1.msra.mxu0 0.0
        %816 = vmatprep.subr.mxu0 0.0
        %817 = vmatpush1.msra.mxu0 0.0
        %818 = vmatprep.subr.mxu0 0.0
        %819 = vmatpush1.msra.mxu0 0.0
        %820 = vmatprep.subr.mxu0 0.0
        %821 = vmatpush1.msra.mxu0 0.0
        %822 = vmatprep.subr.mxu0 0.0
        %823 = vmatpush1.msra.mxu0 0.0
        %824 = vmatprep.subr.mxu0 0.0
        %825 = vmatpush1.msra.mxu0 0.0
        %826 = vmatprep.subr.mxu0 0.0
        %827 = vmatpush1.msra.mxu0 0.0
        %828 = vmatprep.subr.mxu0 0.0
        %829 = vmatpush1.msra.mxu0 0.0
        %830 = vmatprep.subr.mxu0 0.0
        %831 = vmatpush1.msra.mxu0 0.0
        %832 = vmatprep.subr.mxu0 0.0
        %833 = vmatpush1.msra.mxu0 0.0
        %834 = vmatprep.subr.mxu0 0.0
        %835 = vmatpush1.msra.mxu0 0.0
        %836 = vmatprep.subr.mxu0 0.0
        %837 = vmatpush1.msra.mxu0 0.0
        %838 = vmatprep.subr.mxu0 0.0
        %839 = vmatpush1.msra.mxu0 0.0
        %840 = vmatprep.subr.mxu0 0.0
        %841 = vmatpush1.msra.mxu0 0.0
        %842 = vmatprep.subr.mxu0 0.0
        %843 = vmatpush1.msra.mxu0 0.0
        %844 = vmatprep.subr.mxu0 0.0
        %845 = vmatpush1.msra.mxu0 0.0
        %846 = vmatprep.subr.mxu0 0.0
        %847 = vmatpush1.msra.mxu0 0.0
        %848 = vmatprep.subr.mxu0 0.0
        %849 = vmatpush1.msra.mxu0 0.0
        %850 = vmatprep.subr.mxu0 0.0
        %851 = vmatpush1.msra.mxu0 0.0
        %852 = vmatprep.subr.mxu0 0.0
        %853 = vmatpush1.msra.mxu0 0.0
        %854 = vmatprep.subr.mxu0 0.0
        %855 = vmatpush1.msra.mxu0 0.0
        %856 = vmatprep.mubr.f32.mxu0 0.0
        %857 = vmatmul.mubr.f32.gmra.mrb[0].mxu0 %v720
        %v858 = vpop.f32.mrb[0].mxu0
        %v859 = vadd.f32 %v695, %v858
        %v860 = vpop.f32.mrb[0].mxu0
        %861 = vdwg.mxu0
        %v862 = vsub.f32 %v859, %v789
        %v863 = vmul.f32 %v862, %v862
        %v865 = vrot.slane %v863, 1
        %v867 = vadd.f32 %v863, %v865
        %v868 = vrot.slane %v863, 2
        %v870 = vadd.f32 %v867, %v868
        %v871 = vsub.f32 0.0, %v870
        %v872 = vmul.f32 %v871, 0.04
        %v873 = vmul.f32 %v872, 1.442695
        %v874 = vpow.pop %v873
        %v875 = vmul.f32 %v874, -0.08
        %v876 = vlaneseq
        %v877 = vshrl.u32 %v876, 7
        %v878 = vsub.s32 0, %v877
        %v879 = vrot.slane %v875, %v878
        %v880 = vmul.f32 %v879, %v862
        %881 = vmatprep.subr.mxu0 0.0
        %882 = vmatpush1.xpose.msra.mxu0 %v716
        %883 = vmatprep.subr.mxu0 0.0
        %884 = vmatpush1.xpose.msra.mxu0 %v717
        %885 = vmatprep.subr.mxu0 0.0
        %886 = vmatpush1.xpose.msra.mxu0 0.0
        %887 = vmatprep.subr.mxu0 0.0
        %888 = vmatpush1.xpose.msra.mxu0 0.0
        %889 = vmatprep.subr.mxu0 0.0
        %890 = vmatpush1.xpose.msra.mxu0 0.0
        %891 = vmatprep.subr.mxu0 0.0
        %892 = vmatpush1.xpose.msra.mxu0 0.0
        %893 = vmatprep.subr.mxu0 0.0
        %894 = vmatpush1.xpose.msra.mxu0 0.0
        %895 = vmatprep.subr.mxu0 0.0
        %896 = vmatpush1.xpose.msra.mxu0 0.0
        %897 = vmatprep.subr.mxu0 0.0
        %898 = vmatpush1.xpose.msra.mxu0 0.0
        %899 = vmatprep.subr.mxu0 0.0
        %900 = vmatpush1.xpose.msra.mxu0 0.0
        %901 = vmatprep.subr.mxu0 0.0
        %902 = vmatpush1.xpose.msra.mxu0 0.0
        %903 = vmatprep.subr.mxu0 0.0
        %904 = vmatpush1.xpose.msra.mxu0 0.0
        %905 = vmatprep.subr.mxu0 0.0
        %906 = vmatpush1.xpose.msra.mxu0 0.0
        %907 = vmatprep.subr.mxu0 0.0
        %908 = vmatpush1.xpose.msra.mxu0 0.0
        %909 = vmatprep.subr.mxu0 0.0
        %910 = vmatpush1.xpose.msra.mxu0 0.0
        %911 = vmatprep.subr.mxu0 0.0
        %912 = vmatpush1.xpose.msra.mxu0 0.0
        %913 = vmatprep.subr.mxu0 0.0
        %914 = vmatpush1.xpose.msra.mxu0 0.0
        %915 = vmatprep.subr.mxu0 0.0
        %916 = vmatpush1.xpose.msra.mxu0 0.0
        %917 = vmatprep.subr.mxu0 0.0
        %918 = vmatpush1.xpose.msra.mxu0 0.0
        %919 = vmatprep.subr.mxu0 0.0
        %920 = vmatpush1.xpose.msra.mxu0 0.0
        %921 = vmatprep.subr.mxu0 0.0
        %922 = vmatpush1.xpose.msra.mxu0 0.0
        %923 = vmatprep.subr.mxu0 0.0
        %924 = vmatpush1.xpose.msra.mxu0 0.0
        %925 = vmatprep.subr.mxu0 0.0
        %926 = vmatpush1.xpose.msra.mxu0 0.0
        %927 = vmatprep.subr.mxu0 0.0
        %928 = vmatpush1.xpose.msra.mxu0 0.0
        %929 = vmatprep.subr.mxu0 0.0
        %930 = vmatpush1.xpose.msra.mxu0 0.0
        %931 = vmatprep.subr.mxu0 0.0
        %932 = vmatpush1.xpose.msra.mxu0 0.0
        %933 = vmatprep.subr.mxu0 0.0
        %934 = vmatpush1.xpose.msra.mxu0 0.0
        %935 = vmatprep.subr.mxu0 0.0
        %936 = vmatpush1.xpose.msra.mxu0 0.0
        %937 = vmatprep.subr.mxu0 0.0
        %938 = vmatpush1.xpose.msra.mxu0 0.0
        %939 = vmatprep.subr.mxu0 0.0
        %940 = vmatpush1.xpose.msra.mxu0 0.0
        %941 = vmatprep.subr.mxu0 0.0
        %942 = vmatpush1.xpose.msra.mxu0 0.0
        %943 = vmatprep.subr.mxu0 0.0
        %944 = vmatpush1.xpose.msra.mxu0 0.0
        %945 = vmatprep.mubr.f32.mxu0 0.0
        %946 = vmatmul.mubr.f32.gmra.mrb[0].mxu0 %v880
        %v947 = vpop.f32.mrb[0].mxu0
        %v948 = vadd.f32 0.0, %v947
        %v949 = vpop.f32.mrb[0].mxu0
        %950 = vdwg.mxu0
        %951 = vmatprep.subr.mxu0 0.0
        %952 = vmatpush1.xpose.msra.mxu0 %v706
        %953 = vmatprep.subr.mxu0 0.0
        %954 = vmatpush1.xpose.msra.mxu0 %v707
        %955 = vmatprep.subr.mxu0 0.0
        %956 = vmatpush1.xpose.msra.mxu0 0.0
        %957 = vmatprep.subr.mxu0 0.0
        %958 = vmatpush1.xpose.msra.mxu0 0.0
        %959 = vmatprep.subr.mxu0 0.0
        %960 = vmatpush1.xpose.msra.mxu0 0.0
        %961 = vmatprep.subr.mxu0 0.0
        %962 = vmatpush1.xpose.msra.mxu0 0.0
        %963 = vmatprep.subr.mxu0 0.0
        %964 = vmatpush1.xpose.msra.mxu0 0.0
        %965 = vmatprep.subr.mxu0 0.0
        %966 = vmatpush1.xpose.msra.mxu0 0.0
        %967 = vmatprep.subr.mxu0 0.0
        %968 = vmatpush1.xpose.msra.mxu0 0.0
        %969 = vmatprep.subr.mxu0 0.0
        %970 = vmatpush1.xpose.msra.mxu0 0.0
        %971 = vmatprep.subr.mxu0 0.0
        %972 = vmatpush1.xpose.msra.mxu0 0.0
        %973 = vmatprep.subr.mxu0 0.0
        %974 = vmatpush1.xpose.msra.mxu0 0.0
        %975 = vmatprep.subr.mxu0 0.0
        %976 = vmatpush1.xpose.msra.mxu0 0.0
        %977 = vmatprep.subr.mxu0 0.0
        %978 = vmatpush1.xpose.msra.mxu0 0.0
        %979 = vmatprep.subr.mxu0 0.0
        %980 = vmatpush1.xpose.msra.mxu0 0.0
        %981 = vmatprep.subr.mxu0 0.0
        %982 = vmatpush1.xpose.msra.mxu0 0.0
        %983 = vmatprep.subr.mxu0 0.0
        %984 = vmatpush1.xpose.msra.mxu0 0.0
        %985 = vmatprep.subr.mxu0 0.0
        %986 = vmatpush1.xpose.msra.mxu0 0.0
        %987 = vmatprep.subr.mxu0 0.0
        %988 = vmatpush1.xpose.msra.mxu0 0.0
        %989 = vmatprep.subr.mxu0 0.0
        %990 = vmatpush1.xpose.msra.mxu0 0.0
        %991 = vmatprep.subr.mxu0 0.0
        %992 = vmatpush1.xpose.msra.mxu0 0.0
        %993 = vmatprep.subr.mxu0 0.0
        %994 = vmatpush1.xpose.msra.mxu0 0.0
        %995 = vmatprep.subr.mxu0 0.0
        %996 = vmatpush1.xpose.msra.mxu0 0.0
        %997 = vmatprep.subr.mxu0 0.0
        %998 = vmatpush1.xpose.msra.mxu0 0.0
        %999 = vmatprep.subr.mxu0 0.0
        %1000 = vmatpush1.xpose.msra.mxu0 0.0
        %1001 = vmatprep.subr.mxu0 0.0
        %1002 = vmatpush1.xpose.msra.mxu0 0.0
        %1003 = vmatprep.subr.mxu0 0.0
        %1004 = vmatpush1.xpose.msra.mxu0 0.0
        %1005 = vmatprep.subr.mxu0 0.0
        %1006 = vmatpush1.xpose.msra.mxu0 0.0
        %1007 = vmatprep.subr.mxu0 0.0
        %1008 = vmatpush1.xpose.msra.mxu0 0.0
        %1009 = vmatprep.subr.mxu0 0.0
        %1010 = vmatpush1.xpose.msra.mxu0 0.0
        %1011 = vmatprep.subr.mxu0 0.0
        %1012 = vmatpush1.xpose.msra.mxu0 0.0
        %1013 = vmatprep.subr.mxu0 0.0
        %1014 = vmatpush1.xpose.msra.mxu0 0.0
        %1015 = vmatprep.mubr.f32.mxu0 0.0
        %1016 = vmatmul.mubr.f32.gmra.mrb[0].mxu0 %v880
        %v1017 = vpop.f32.mrb[0].mxu0
        %v1018 = vadd.f32 0.0, %v1017
        %v1019 = vpop.f32.mrb[0].mxu0
        %1020 = vdwg.mxu0
        %v1021 = vld [vmem:[#allocation5] sm:$0x7]
        %v1022 = vsub.f32 %v948, %v1018
        %v1023 = vmul.f32 %v1022, -2.0
        %v1024 = vadd.f32 %v1021, %v1023
        %vm1025 = vcmask 124928
        %1026 = vst.msk [vmem:[#allocation5] sm:$0x7] %vm1025, %v1024
        %v1027 = vld [vmem:[#allocation3] sm:$0x1]
        %1028 = vmatprep.subr.mxu0 0.0
        %1029 = vmatpush1.xpose.msra.mxu0 %v556
        %1030 = vmatprep.subr.mxu0 0.0
        %1031 = vmatpush1.xpose.msra.mxu0 0.0
        %1032 = vmatprep.subr.mxu0 0.0
        %1033 = vmatpush1.xpose.msra.mxu0 0.0
        %1034 = vmatprep.subr.mxu0 0.0
        %1035 = vmatpush1.xpose.msra.mxu0 0.0
        %1036 = vmatprep.subr.mxu0 0.0
        %1037 = vmatpush1.xpose.msra.mxu0 0.0
        %1038 = vmatprep.subr.mxu0 0.0
        %1039 = vmatpush1.xpose.msra.mxu0 0.0
        %1040 = vmatprep.subr.mxu0 0.0
        %1041 = vmatpush1.xpose.msra.mxu0 0.0
        %1042 = vmatprep.subr.mxu0 0.0
        %1043 = vmatpush1.xpose.msra.mxu0 0.0
        %1044 = vmatprep.subr.mxu0 0.0
        %1045 = vmatpush1.xpose.msra.mxu0 0.0
        %1046 = vmatprep.subr.mxu0 0.0
        %1047 = vmatpush1.xpose.msra.mxu0 0.0
        %1048 = vmatprep.subr.mxu0 0.0
        %1049 = vmatpush1.xpose.msra.mxu0 0.0
        %1050 = vmatprep.subr.mxu0 0.0
        %1051 = vmatpush1.xpose.msra.mxu0 0.0
        %1052 = vmatprep.subr.mxu0 0.0
        %1053 = vmatpush1.xpose.msra.mxu0 0.0
        %1054 = vmatprep.subr.mxu0 0.0
        %1055 = vmatpush1.xpose.msra.mxu0 0.0
        %1056 = vmatprep.subr.mxu0 0.0
        %1057 = vmatpush1.xpose.msra.mxu0 0.0
        %1058 = vmatprep.subr.mxu0 0.0
        %1059 = vmatpush1.xpose.msra.mxu0 0.0
        %1060 = vmatprep.subr.mxu0 0.0
        %1061 = vmatpush1.xpose.msra.mxu0 0.0
        %1062 = vmatprep.subr.mxu0 0.0
        %1063 = vmatpush1.xpose.msra.mxu0 0.0
        %1064 = vmatprep.subr.mxu0 0.0
        %1065 = vmatpush1.xpose.msra.mxu0 0.0
        %1066 = vmatprep.subr.mxu0 0.0
        %1067 = vmatpush1.xpose.msra.mxu0 0.0
        %1068 = vmatprep.subr.mxu0 0.0
        %1069 = vmatpush1.xpose.msra.mxu0 0.0
        %1070 = vmatprep.subr.mxu0 0.0
        %1071 = vmatpush1.xpose.msra.mxu0 0.0
        %1072 = vmatprep.subr.mxu0 0.0
        %1073 = vmatpush1.xpose.msra.mxu0 0.0
        %1074 = vmatprep.subr.mxu0 0.0
        %1075 = vmatpush1.xpose.msra.mxu0 0.0
        %1076 = vmatprep.subr.mxu0 0.0
        %1077 = vmatpush1.xpose.msra.mxu0 0.0
        %1078 = vmatprep.subr.mxu0 0.0
        %1079 = vmatpush1.xpose.msra.mxu0 0.0
        %1080 = vmatprep.subr.mxu0 0.0
        %1081 = vmatpush1.xpose.msra.mxu0 0.0
        %1082 = vmatprep.subr.mxu0 0.0
        %1083 = vmatpush1.xpose.msra.mxu0 0.0
        %1084 = vmatprep.subr.mxu0 0.0
        %1085 = vmatpush1.xpose.msra.mxu0 0.0
        %1086 = vmatprep.subr.mxu0 0.0
        %1087 = vmatpush1.xpose.msra.mxu0 0.0
        %1088 = vmatprep.subr.mxu0 0.0
        %1089 = vmatpush1.xpose.msra.mxu0 0.0
        %1090 = vmatprep.subr.mxu0 0.0
        %1091 = vmatpush1.xpose.msra.mxu0 0.0
        %1092 = vmatprep.mubr.f32.mxu0 0.0
        %1093 = vmatmul.mubr.f32.gmra.mrb[0].mxu0 %v874
        %v1094 = vpop.f32.mrb[0].mxu0
        %v1095 = vadd.f32 0.0, %v1094
        %v1096 = vpop.f32.mrb[0].mxu0
        %1097 = vdwg.mxu0
        %v1098 = vadd.f32 %v1027, %v1095
        %vm1099 = vcmask 8192
        %1100 = vst.msk [vmem:[#allocation3] sm:$0x1] %vm1099, %v1098
        %v1101 = vmul.f32 %v862, %v880
        %v1103 = vrot.slane %v880, 1
        %v1105 = vmul.f32 %v862, %v1103
        %v1106 = vrot.slane %v880, 2
        %v1108 = vmul.f32 %v862, %v1106
        %v1109 = vrot.slane %v880, 7
        %v1111 = vmul.f32 %v862, %v1109
        %v1112 = vrot.slane %v880, 6
        %v1114 = vmul.f32 %v862, %v1112
        %v1116 = vrot.slane %v1105, 7
        %v1119 = vrot.slane %v1108, 6
        %v1122 = vrot.slane %v1111, 6
        %v1125 = vrot.slane %v1101, 5
        %v1127 = vrot.slane %v1105, 4
        %v1130 = vrot.slane %v1114, 4
        %v1132 = vrot.slane %v1111, 3
        %v1134 = vrot.slane %v1101, 2
        %v1136 = vsel %vm693, %v1101, %v1116
        %v1137 = vsel %vm564, %v1136, %v1119
        %vm1138 = vcmask 1042432
        %v1139 = vsel %vm1138, %v1137, %v1122
        %vm1140 = vcmask 1043456
        %v1141 = vsel %vm1140, %v1139, %v1125
        %vm1142 = vcmask 1044480
        %v1143 = vsel %vm1142, %v1141, %v1127
        %vm1144 = vcmask 1045504
        %v1145 = vsel %vm1144, %v1143, %v1130
        %vm1146 = vcmask 1046528
        %v1147 = vsel %vm1146, %v1145, %v1132
        %v1148 = vld [vmem:[#allocation7] sm:$0x3]
        %1149 = vmatprep.subr.mxu0 0.0
        %1150 = vmatpush1.xpose.msra.mxu0 %v1147
        %1151 = vmatprep.subr.mxu0 0.0
        %1152 = vmatpush1.xpose.msra.mxu0 %v1134
        %1153 = vmatprep.subr.mxu0 0.0
        %1154 = vmatpush1.xpose.msra.mxu0 0.0
        %1155 = vmatprep.subr.mxu0 0.0
        %1156 = vmatpush1.xpose.msra.mxu0 0.0
        %1157 = vmatprep.subr.mxu0 0.0
        %1158 = vmatpush1.xpose.msra.mxu0 0.0
        %1159 = vmatprep.subr.mxu0 0.0
        %1160 = vmatpush1.xpose.msra.mxu0 0.0
        %1161 = vmatprep.subr.mxu0 0.0
        %1162 = vmatpush1.xpose.msra.mxu0 0.0
        %1163 = vmatprep.subr.mxu0 0.0
        %1164 = vmatpush1.xpose.msra.mxu0 0.0
        %1165 = vmatprep.subr.mxu0 0.0
        %1166 = vmatpush1.xpose.msra.mxu0 0.0
        %1167 = vmatprep.subr.mxu0 0.0
        %1168 = vmatpush1.xpose.msra.mxu0 0.0
        %1169 = vmatprep.subr.mxu0 0.0
        %1170 = vmatpush1.xpose.msra.mxu0 0.0
        %1171 = vmatprep.subr.mxu0 0.0
        %1172 = vmatpush1.xpose.msra.mxu0 0.0
        %1173 = vmatprep.subr.mxu0 0.0
        %1174 = vmatpush1.xpose.msra.mxu0 0.0
        %1175 = vmatprep.subr.mxu0 0.0
        %1176 = vmatpush1.xpose.msra.mxu0 0.0
        %1177 = vmatprep.subr.mxu0 0.0
        %1178 = vmatpush1.xpose.msra.mxu0 0.0
        %1179 = vmatprep.subr.mxu0 0.0
        %1180 = vmatpush1.xpose.msra.mxu0 0.0
        %1181 = vmatprep.subr.mxu0 0.0
        %1182 = vmatpush1.xpose.msra.mxu0 0.0
        %1183 = vmatprep.subr.mxu0 0.0
        %1184 = vmatpush1.xpose.msra.mxu0 0.0
        %1185 = vmatprep.subr.mxu0 0.0
        %1186 = vmatpush1.xpose.msra.mxu0 0.0
        %1187 = vmatprep.subr.mxu0 0.0
        %1188 = vmatpush1.xpose.msra.mxu0 0.0
        %1189 = vmatprep.subr.mxu0 0.0
        %1190 = vmatpush1.xpose.msra.mxu0 0.0
        %1191 = vmatprep.subr.mxu0 0.0
        %1192 = vmatpush1.xpose.msra.mxu0 0.0
        %1193 = vmatprep.subr.mxu0 0.0
        %1194 = vmatpush1.xpose.msra.mxu0 0.0
        %1195 = vmatprep.subr.mxu0 0.0
        %1196 = vmatpush1.xpose.msra.mxu0 0.0
        %1197 = vmatprep.subr.mxu0 0.0
        %1198 = vmatpush1.xpose.msra.mxu0 0.0
        %1199 = vmatprep.subr.mxu0 0.0
        %1200 = vmatpush1.xpose.msra.mxu0 0.0
        %1201 = vmatprep.subr.mxu0 0.0
        %1202 = vmatpush1.xpose.msra.mxu0 0.0
        %1203 = vmatprep.subr.mxu0 0.0
        %1204 = vmatpush1.xpose.msra.mxu0 0.0
        %1205 = vmatprep.subr.mxu0 0.0
        %1206 = vmatpush1.xpose.msra.mxu0 0.0
        %1207 = vmatprep.subr.mxu0 0.0
        %1208 = vmatpush1.xpose.msra.mxu0 0.0
        %1209 = vmatprep.subr.mxu0 0.0
        %1210 = vmatpush1.xpose.msra.mxu0 0.0
        %1211 = vmatprep.subr.mxu0 0.0
        %1212 = vmatpush1.xpose.msra.mxu0 0.0
        %1213 = vmatprep.mubr.f32.mxu0 0.0
        %1214 = vmatmul.mubr.f32.gmra.mrb[0].mxu0 %v556
        %v1215 = vpop.f32.mrb[0].mxu0
        %v1216 = vadd.f32 0.0, %v1215
        %v1217 = vpop.f32.mrb[0].mxu0
        %1218 = vdwg.mxu0
        %v1219 = vadd.f32 %v1148, %v1216
        %vm1220 = vcmask 66560
        %1221 = vst.msk [vmem:[#allocation7] sm:$0x3] %vm1220, %v1219
        %p1222 = scmp.eq.s32.totalorder %s24, 1
        // Predicated region
        $region57: #{tpu_custom_call.1} parent=51 // pred_check
          %p1223 = pneg %p1222
        $region58: #{tpu_custom_call.1} parent=51 // pred_check_branch
          %1225 = sbr.rel (%p1223) target = $region60
        $region59: #{tpu_custom_call.1} parent=51 // pred_region
          %v1226 = vld [vmem:[%s2] sm:$0x1]
          %v1227 = vlaneseq
          %v1228 = vshrl.u32 %v1227, 7
          %v1229 = vsub.s32 0, %v1228
          %v1230 = vrot.slane %v1226, %v1229
          %vm1231 = vcmp.eq.s32.totalorder %v549, %v1230
          %v1232 = vsel %vm1231, 1, 0
          %v1233 = vcvt.s32.f32 %v1232
          %v1234 = vld [vmem:[%s3] sm:$0x1]
          %v1236 = vsel %vm718, %v1234, 0
          %v1239 = vsel %vm718, %v1233, 0
          %1241 = vmatprep.subr.mxu0 0.0
          %1242 = vmatpush1.xpose.msra.mxu0 %v1239
          %1243 = vmatprep.subr.mxu0 0.0
          %1244 = vmatpush1.xpose.msra.mxu0 0.0
          %1245 = vmatprep.subr.mxu0 0.0
          %1246 = vmatpush1.xpose.msra.mxu0 0.0
          %1247 = vmatprep.subr.mxu0 0.0
          %1248 = vmatpush1.xpose.msra.mxu0 0.0
          %1249 = vmatprep.subr.mxu0 0.0
          %1250 = vmatpush1.xpose.msra.mxu0 0.0
          %1251 = vmatprep.subr.mxu0 0.0
          %1252 = vmatpush1.xpose.msra.mxu0 0.0
          %1253 = vmatprep.subr.mxu0 0.0
          %1254 = vmatpush1.xpose.msra.mxu0 0.0
          %1255 = vmatprep.subr.mxu0 0.0
          %1256 = vmatpush1.xpose.msra.mxu0 0.0
          %1257 = vmatprep.subr.mxu0 0.0
          %1258 = vmatpush1.xpose.msra.mxu0 0.0
          %1259 = vmatprep.subr.mxu0 0.0
          %1260 = vmatpush1.xpose.msra.mxu0 0.0
          %1261 = vmatprep.subr.mxu0 0.0
          %1262 = vmatpush1.xpose.msra.mxu0 0.0
          %1263 = vmatprep.subr.mxu0 0.0
          %1264 = vmatpush1.xpose.msra.mxu0 0.0
          %1265 = vmatprep.subr.mxu0 0.0
          %1266 = vmatpush1.xpose.msra.mxu0 0.0
          %1267 = vmatprep.subr.mxu0 0.0
          %1268 = vmatpush1.xpose.msra.mxu0 0.0
          %1269 = vmatprep.subr.mxu0 0.0
          %1270 = vmatpush1.xpose.msra.mxu0 0.0
          %1271 = vmatprep.subr.mxu0 0.0
          %1272 = vmatpush1.xpose.msra.mxu0 0.0
          %1273 = vmatprep.subr.mxu0 0.0
          %1274 = vmatpush1.xpose.msra.mxu0 0.0
          %1275 = vmatprep.subr.mxu0 0.0
          %1276 = vmatpush1.xpose.msra.mxu0 0.0
          %1277 = vmatprep.subr.mxu0 0.0
          %1278 = vmatpush1.xpose.msra.mxu0 0.0
          %1279 = vmatprep.subr.mxu0 0.0
          %1280 = vmatpush1.xpose.msra.mxu0 0.0
          %1281 = vmatprep.subr.mxu0 0.0
          %1282 = vmatpush1.xpose.msra.mxu0 0.0
          %1283 = vmatprep.subr.mxu0 0.0
          %1284 = vmatpush1.xpose.msra.mxu0 0.0
          %1285 = vmatprep.subr.mxu0 0.0
          %1286 = vmatpush1.xpose.msra.mxu0 0.0
          %1287 = vmatprep.subr.mxu0 0.0
          %1288 = vmatpush1.xpose.msra.mxu0 0.0
          %1289 = vmatprep.subr.mxu0 0.0
          %1290 = vmatpush1.xpose.msra.mxu0 0.0
          %1291 = vmatprep.subr.mxu0 0.0
          %1292 = vmatpush1.xpose.msra.mxu0 0.0
          %1293 = vmatprep.subr.mxu0 0.0
          %1294 = vmatpush1.xpose.msra.mxu0 0.0
          %1295 = vmatprep.subr.mxu0 0.0
          %1296 = vmatpush1.xpose.msra.mxu0 0.0
          %1297 = vmatprep.subr.mxu0 0.0
          %1298 = vmatpush1.xpose.msra.mxu0 0.0
          %1299 = vmatprep.subr.mxu0 0.0
          %1300 = vmatpush1.xpose.msra.mxu0 0.0
          %1301 = vmatprep.subr.mxu0 0.0
          %1302 = vmatpush1.xpose.msra.mxu0 0.0
          %1303 = vmatprep.subr.mxu0 0.0
          %1304 = vmatpush1.xpose.msra.mxu0 0.0
          %1305 = vmatprep.mubr.f32.mxu0 0.0
          %1306 = vmatmul.mubr.f32.gmra.mrb[0].mxu0 %v1236
          %v1307 = vpop.f32.mrb[0].mxu0
          %v1308 = vadd.f32 0.0, %v1307
          %v1309 = vpop.f32.mrb[0].mxu0
          %1310 = vdwg.mxu0
          %v1311 = vld [vmem:[#allocation3] sm:$0x1]
          %v1312 = vmul.f32 %v1311, 2.0
          %v1313 = vadd.f32 %v1312, 0.1
          %v1314 = vadd.f32 %v1313, %v1308
          %1315 = vst.msk [vmem:[#allocation3] sm:$0x1] %vm1099, %v1314
          %v1316 = vld [vmem:[#allocation7] sm:$0x3]
          %v1317 = vmul.f32 %v1316, 2.0
          %1318 = vst.msk [vmem:[#allocation7] sm:$0x3] %vm1220, %v1317
        $region60: #{tpu_custom_call.1} parent=51 // pred_fallthru
          _
        // Predicated region
        $region61: #{tpu_custom_call.1} parent=51 // pred_check
          %p1319 = pneg %p225
        $region62: #{tpu_custom_call.1} parent=51 // pred_check_branch
          %1321 = sbr.rel (%p1319) target = $region64
        $region63: #{tpu_custom_call.1} parent=51 // pred_region
          %s1323 = ssub.s32 16, 16
          %1324 = vsyncadd [#allocation4], %s1323
          %s1326 = sshll.u32 [#allocation3], 4
          %s1327 = int_to_ptr.vmem [resolvable:$true] %s1326
          %1329 = dma.vmem_to_hbm [thread:$0]  %s1327, 16, %s8, [#allocation4]
        $region64: #{tpu_custom_call.1} parent=51 // pred_fallthru
          _
        // Predicated region
        $region65: #{tpu_custom_call.1} parent=51 // pred_check
          %p1330 = pneg %p246
        $region66: #{tpu_custom_call.1} parent=51 // pred_check_branch
          %1332 = sbr.rel (%p1330) target = $region68
        $region67: #{tpu_custom_call.1} parent=51 // pred_region
          %s1334 = ssub.s32 64, 64
          %1335 = vsyncadd [#allocation6], %s1334
          %s1337 = sshll.u32 [#allocation5], 4
          %s1338 = int_to_ptr.vmem [resolvable:$true] %s1337
          %1340 = dma.vmem_to_hbm [thread:$0]  %s1338, 64, %s9, [#allocation6]
        $region68: #{tpu_custom_call.1} parent=51 // pred_fallthru
          _
        // Predicated region
        $region69: #{tpu_custom_call.1} parent=51 // pred_check
          %p1341 = pneg %p267
        $region70: #{tpu_custom_call.1} parent=51 // pred_check_branch
          %1343 = sbr.rel (%p1341) target = $region72
        $region71: #{tpu_custom_call.1} parent=51 // pred_region
          %s1345 = ssub.s32 32, 32
          %1346 = vsyncadd [#allocation6], %s1345
          %s1348 = sshll.u32 [#allocation7], 4
          %s1349 = int_to_ptr.vmem [resolvable:$true] %s1348
          %1351 = dma.vmem_to_hbm [thread:$0]  %s1349, 32, %s10, [#allocation6]
        $region72: #{tpu_custom_call.1} parent=51 // pred_fallthru
          _
        // Predicated region
        $region73: #{tpu_custom_call.1} parent=51 // pred_check
          %p1352 = pneg %p225
        $region74: #{tpu_custom_call.1} parent=51 // pred_check_branch
          %1354 = sbr.rel (%p1352) target = $region76
        $region75: #{tpu_custom_call.1} parent=51 // pred_region
          %1355 = dma.done [#allocation4], 16
        $region76: #{tpu_custom_call.1} parent=51 // pred_fallthru
          _
        // Predicated region
        $region77: #{tpu_custom_call.1} parent=51 // pred_check
          %p1356 = pneg %p246
        $region78: #{tpu_custom_call.1} parent=51 // pred_check_branch
          %1358 = sbr.rel (%p1356) target = $region80
        $region79: #{tpu_custom_call.1} parent=51 // pred_region
          %1359 = dma.done [#allocation6], 64
        $region80: #{tpu_custom_call.1} parent=51 // pred_fallthru
          _
        // Predicated region
        $region81: #{tpu_custom_call.1} parent=51 // pred_check
          %p1360 = pneg %p267
        $region82: #{tpu_custom_call.1} parent=51 // pred_check_branch
          %1362 = sbr.rel (%p1360) target = $region84
        $region83: #{tpu_custom_call.1} parent=51 // pred_region
          %1363 = dma.done [#allocation6], 32
        $region84: #{tpu_custom_call.1} parent=51 // pred_fallthru
          _
      $region52: #{tpu_custom_call.1} parent=5 // pred_fallthru
        _
      %p1364 = scmp.le.s32.totalorder 2, %s19
      // Predicated region
      $region85: #{tpu_custom_call.1} parent=5 // pred_check
        %p1365 = pneg %p1364
      $region86: #{tpu_custom_call.1} parent=5 // pred_check_branch
        %1367 = sbr.rel (%p1365) target = $region88
      $region87: #{tpu_custom_call.1} parent=5 // pred_region
        %s1368 = ssub.s32 %s19, 2
      $region88: #{tpu_custom_call.1} parent=5 // pred_fallthru
        _
    $region6: #{tpu_custom_call.1} parent=1 // loop_footer
      %s23 = sadd.s32 1, %s19
    $region7: #{tpu_custom_call.1} parent=1 // loop_footer_branch
      %18 = sbr.rel target = $region3
    $region8: #{tpu_custom_call.1} parent=1 // loop_exit
      _
    %1369 = vsyncpa [#allocation4], 1
    %s1370 = scalar_lea.sflag [#allocation4], 1
    %1371 = vsyncpa %s1370, 1
    %1372 = vsyncpa [#allocation6], 1

</llo_original>
